<compile_context>
chip_gen: v5e
topology: v5e:2x2
jax: 0.10.0
libtpu: 0.0.40
codegen_flags: <defaults>
</compile_context>

<pallas_src>
import functools

import jax
import jax.numpy as jnp
from jax.experimental import pallas as pl
from jax.experimental.pallas import tpu as pltpu

LN_EPS = 1e-5

PARAM_ORDER = (
    "ln1_g", "ln1_b", "wqkv", "bqkv", "wo", "bo",
    "ln2_g", "ln2_b", "w1", "b1", "w2", "b2",
)

MATMUL_WEIGHTS = ("wqkv", "wo", "w1", "w2")


def _layer_norm(x, g, b):
    mu = jnp.mean(x, axis=-1, keepdims=True)
    var = jnp.mean(jnp.square(x - mu), axis=-1, keepdims=True)
    return (x - mu) * jax.lax.rsqrt(var + LN_EPS) * g + b


def _silu(x):
    # torchmultimodal gpt.py SiLU: sigmoid(1.702 * x) * x
    return jax.nn.sigmoid(1.702 * x) * x


def decoder_kernel(bias_ref, x_ref, ln1g, ln1b, wqkv, bqkv, wo, bo,
                   ln2g, ln2b, w1, b1, w2, b2, out_ref,
                   h_ref, ctx_ref, *, n_head, mlp_row_tile, approx_recip):
    layer = pl.program_id(1)
    Bb, S, D = out_ref.shape
    n_rows = Bb * S
    hd = D // n_head
    scale = 1.0 / float(hd) ** 0.5

    # Seed the VMEM-resident hidden-state carry at the first layer of this
    # batch block.  (Layer axis must stay innermost + "arbitrary".)
    @pl.when(layer == 0)
    def _():
        h_ref[...] = x_ref[...].reshape(n_rows, D)

    h2 = h_ref[...]                      # (Bb*S, D) f32 carry
    bias = bias_ref[...]                 # (S, S) additive causal bias (0 / -1e30), f32 only!

    # ---------------- attention block (pre-LN) ----------------
    a_in = _layer_norm(h2, ln1g[0], ln1b[0])                               # f32
    qkv = (jnp.dot(a_in.astype(jnp.bfloat16), wqkv[0],
                   preferred_element_type=jnp.float32) + bqkv[0]
           ).astype(jnp.bfloat16)                                          # (Bb*S, 3D) bf16

    for b in range(Bb):                  # static loop over batch block (small)
        rows = qkv[b * S:(b + 1) * S]    # (S, 3D) bf16
        heads = []
        for hi in range(n_head):         # static loop over heads
            lo = hi * hd
            qh = rows[:, lo:lo + hd] * scale          # scale folded into q (bf16)
            kh = rows[:, D + lo:D + lo + hd]
            vh = rows[:, 2 * D + lo:2 * D + lo + hd]
            s = jnp.dot(qh, kh.T, preferred_element_type=jnp.float32) + bias
            s = s - jnp.max(s, axis=-1, keepdims=True)
            p = jnp.exp(s)
            denom = jnp.sum(p, axis=-1, keepdims=True)
            if approx_recip:
                p = p * pl.reciprocal(denom, approx=True)   # EUP slot; ~2^-12 rel err
            else:
                p = p / denom
            ctx = jnp.dot(p.astype(jnp.bfloat16), vh,
                          preferred_element_type=jnp.float32)              # (S, hd)
            heads.append(ctx.astype(jnp.bfloat16))
        # Lane-concat the heads and park them in the ctx scratch (bf16);
        # bounds liveness to one (S, D) block per batch element.
        ctx_ref[b] = jnp.concatenate(heads, axis=-1)                       # (S, D) bf16

    # ONE full-width (K = D) output projection on the whole batch block.
    attn = jnp.dot(ctx_ref[...].reshape(n_rows, D), wo[0],
                   preferred_element_type=jnp.float32) + bo[0]             # (Bb*S, D)
    h_ref[...] = h2 + attn

    # ---------------- MLP block (pre-LN), row-tiled ----------------
    T = mlp_row_tile
    n_chunks = n_rows // T
    ln2g_v = ln2g[0]
    ln2b_v = ln2b[0]
    w1_v = w1[0]
    b1_v = b1[0]
    w2_v = w2[0]
    b2_v = b2[0]

    @pl.loop(0, n_chunks)
    def _(c):
        r = pl.multiple_of(c * T, T)
        xc = h_ref[pl.ds(r, T), :]                                         # (T, D) f32
        m_in = _layer_norm(xc, ln2g_v, ln2b_v)
        m = jnp.dot(m_in.astype(jnp.bfloat16), w1_v,
                    preferred_element_type=jnp.float32) + b1_v             # (T, 4D)
        m = _silu(m)
        m = jnp.dot(m.astype(jnp.bfloat16), w2_v,
                    preferred_element_type=jnp.float32) + b2_v             # (T, D)
        h_ref[pl.ds(r, T), :] = xc + m

    # Emit the final hidden state once, after the last layer.
    @pl.when(layer == pl.num_programs(1) - 1)
    def _():
        out_ref[...] = h_ref[...].reshape(Bb, S, D)


def transformer_decoder(x, params, *, n_head, causal=True, batch_block=None,
                        mlp_row_tile=None, approx_softmax_recip=True):
    """Pallas implementation of TransformerDecoder.forward (last_hidden_states)."""
    B, S, D = x.shape
    L = params["wqkv"].shape[0]
    H = n_head
    assert D % n_head == 0, "emb_dim must be divisible by n_head"

    # ---- per-chip info (best effort) ----
    try:
        vmem_cap = int(pltpu.get_tpu_info().vmem_capacity_bytes)
    except Exception:
        vmem_cap = 64 << 20            # conservative (v7x-sized) fallback
    try:
        kind = jax.devices()[0].device_kind.lower()
    except Exception:
        kind = ""
    two_tensorcores = ("v7" in kind) or ("7x" in kind)

    # ---- batch-block selection ----
    if batch_block is None:
        if two_tensorcores and B >= 2 and B % 2 == 0:
            Bb = B // 2                # give the second TensorCore work
        else:
            Bb = B                     # v5e/v6e: weights DMA'd once per layer
    else:
        Bb = int(batch_block)
    assert B % Bb == 0, "batch_block must divide batch"
    nB = B // Bb
    n_rows = Bb * S

    # ---- MLP row tile ----
    if mlp_row_tile is None:
        T = n_rows
        if n_rows > 512:
            for cand in (512, 384, 256, 128, 64, 32, 16, 8):
                if n_rows % cand == 0:
                    T = cand
                    break
    else:
        T = int(mlp_row_tile)
    assert n_rows % T == 0, "mlp_row_tile must divide Bb*S"

    # bf16 weight tiles for the MXU (halves weight DMA); LN/bias params stay f32.
    params = dict(params)
    for k in MATMUL_WEIGHTS:
        params[k] = params[k].astype(jnp.bfloat16)

    # Additive causal bias, built once and kept VMEM-resident.
    if causal:
        tri = jnp.tril(jnp.ones((S, S), dtype=bool))
        attn_bias = jnp.where(tri, 0.0, -1e30).astype(jnp.float32)
    else:
        attn_bias = jnp.zeros((S, S), jnp.float32)

    # Constant-index inputs: single-buffered (second buffer is wasted VMEM).
    bias_spec = pl.BlockSpec((S, S), lambda i, l: (0, 0),
                             pipeline_mode=pl.Buffered(1))
    x_spec = pl.BlockSpec((Bb, S, D), lambda i, l: (i, 0, 0),
                          pipeline_mode=pl.Buffered(1))
    out_spec = pl.BlockSpec((Bb, S, D), lambda i, l: (i, 0, 0))

    def wspec(shape):
        nd = len(shape)
        return pl.BlockSpec((1,) + tuple(shape[1:]),
                            lambda i, l, _nd=nd: (l,) + (0,) * (_nd - 1))

    in_specs = [bias_spec, x_spec] + [wspec(params[k].shape) for k in PARAM_ORDER]

    scratch_shapes = [
        pltpu.VMEM((n_rows, D), jnp.float32),    # hidden-state carry
        pltpu.VMEM((Bb, S, D), jnp.bfloat16),    # per-head context -> wo input
    ]

    # ---- VMEM budget: double-buffered per-layer weights + carries + live
    # intermediates, with headroom; capped at ~80% of physical VMEM.
    w_blk_bytes = sum((params[k].size // L) * params[k].dtype.itemsize
                      for k in PARAM_ORDER)
    carry_bytes = 4 * n_rows * D                 # h_ref f32
    ctx_bytes = 2 * n_rows * D                   # ctx_ref bf16
    io_bytes = 4 * n_rows * D                    # x (single buffer)
    io_bytes += 2 * 4 * n_rows * D               # output block (double buffer)
    io_bytes += 4 * S * S                        # bias
    live_bytes = 2 * n_rows * 3 * D              # qkv bf16
    live_bytes += 4 * n_rows * D                 # attn/residual f32
    live_bytes += 12 * S * S                     # per-head scores/probs f32
    live_bytes += 6 * T * 4 * D                  # MLP hidden chunk (f32 + bf16)
    vmem_needed = (2 * w_blk_bytes + carry_bytes + ctx_bytes + io_bytes +
                   live_bytes + (8 << 20))
    budget = max(int(0.80 * vmem_cap), 32 << 20)
    vmem_limit = int(min(max(vmem_needed, 32 << 20), budget))

    flops = int(L * (24 * B * S * D * D + 4 * B * S * S * D))
    transcendentals = int(L * (B * H * S * S + 4 * B * S * D))
    bytes_accessed = int(nB * L * w_blk_bytes + 8 * B * S * D + 4 * S * S)
    cost = pl.CostEstimate(flops=flops, transcendentals=transcendentals,
                           bytes_accessed=bytes_accessed)

    kernel = functools.partial(decoder_kernel, n_head=n_head, mlp_row_tile=T,
                               approx_recip=approx_softmax_recip)
    return pl.pallas_call(
        kernel,
        out_shape=jax.ShapeDtypeStruct((B, S, D), jnp.float32),
        grid_spec=pltpu.PrefetchScalarGridSpec(
            num_scalar_prefetch=0,
            grid=(nB, L),                      # batch blocks parallel, layers sequential
            in_specs=in_specs,
            out_specs=out_spec,
            scratch_shapes=scratch_shapes,
        ),
        compiler_params=pltpu.CompilerParams(
            dimension_semantics=("parallel", "arbitrary"),
            vmem_limit_bytes=vmem_limit),
        cost_estimate=cost,
    )(attn_bias, x, *[params[k] for k in PARAM_ORDER])


def reference(x, params, *, n_head, causal=True):
    """Pure-JAX reference mirroring the kernel's bf16-matmul / f32-accumulate math."""
    B, S, D = x.shape
    hd = D // n_head
    L = params["wqkv"].shape[0]

    def mm(a, w):
        return jnp.dot(a.astype(jnp.bfloat16), w.astype(jnp.bfloat16),
                       preferred_element_type=jnp.float32)

    h = x
    for l in range(L):
        a_in = _layer_norm(h, params["ln1_g"][l, 0], params["ln1_b"][l, 0])
        qkv = mm(a_in, params["wqkv"][l]) + params["bqkv"][l, 0]
        q, k, v = jnp.split(qkv, 3, axis=-1)
        q = q.reshape(B, S, n_head, hd).transpose(0, 2, 1, 3)
        k = k.reshape(B, S, n_head, hd).transpose(0, 2, 1, 3)
        v = v.reshape(B, S, n_head, hd).transpose(0, 2, 1, 3)
        s = jnp.einsum("bhqd,bhkd->bhqk", q.astype(jnp.bfloat16),
                       k.astype(jnp.bfloat16),
                       preferred_element_type=jnp.float32) / jnp.sqrt(float(hd))
        if causal:
            mask = jnp.tril(jnp.ones((S, S), dtype=bool))
            s = jnp.where(mask, s, -1e30)
        p = jax.nn.softmax(s, axis=-1)
        a = jnp.einsum("bhqk,bhkd->bhqd", p.astype(jnp.bfloat16),
                       v.astype(jnp.bfloat16),
                       preferred_element_type=jnp.float32)
        a = a.transpose(0, 2, 1, 3).reshape(B, S, D)
        a = mm(a, params["wo"][l]) + params["bo"][l, 0]
        h = h + a
        m_in = _layer_norm(h, params["ln2_g"][l, 0], params["ln2_b"][l, 0])
        m = _silu(mm(m_in, params["w1"][l]) + params["b1"][l, 0])
        m = mm(m, params["w2"][l]) + params["b2"][l, 0]
        h = h + m
    return h


def init_params(key, num_layers, d_model):
    """Deterministic synthetic parameters with shapes implied by the module."""
    keys = jax.random.split(key, 6)
    L, D = num_layers, d_model

    def w(k, shape):
        return (0.02 * jax.random.normal(k, shape)).astype(jnp.float32)

    return {
        "ln1_g": jnp.ones((L, 1, D), jnp.float32),
        "ln1_b": jnp.zeros((L, 1, D), jnp.float32),
        "wqkv":  w(keys[0], (L, D, 3 * D)),
        "bqkv":  jnp.zeros((L, 1, 3 * D), jnp.float32),
        "wo":    w(keys[1], (L, D, D)),
        "bo":    jnp.zeros((L, 1, D), jnp.float32),
        "ln2_g": jnp.ones((L, 1, D), jnp.float32),
        "ln2_b": jnp.zeros((L, 1, D), jnp.float32),
        "w1":    w(keys[2], (L, D, 4 * D)),
        "b1":    jnp.zeros((L, 1, 4 * D), jnp.float32),
        "w2":    w(keys[3], (L, 4 * D, D)),
        "b2":    jnp.zeros((L, 1, D), jnp.float32),
    }


if __name__ == "__main__":
    B, S, D = 2, 8, 32          # batch, seq_len, emb_dim (small correctness shapes)
    N_HEAD = 4
    NUM_LAYERS = 2

    key = jax.random.PRNGKey(0)
    k_x, k_p = jax.random.split(key)
    x = jax.random.normal(k_x, (B, S, D), dtype=jnp.float32)
    params = init_params(k_p, NUM_LAYERS, D)

    out = transformer_decoder(x, params, n_head=N_HEAD, causal=True)
    out = jax.block_until_ready(out)

    ref = reference(x, params, n_head=N_HEAD, causal=True)
    assert out.shape == (B, S, D)
    err = jnp.max(jnp.abs(out - ref))
    assert jnp.allclose(out, ref, rtol=1e-2, atol=1e-2), f"mismatch: max abs err {err}"

    print("KERNEL_OK")
</pallas_src>

<mosaic_0001>
module attributes {stable_mosaic.version = 11 : i64} {
  func.func @decoder_kernel(%arg0: i32, %arg1: i32, %arg2: memref<8x8xf32, #tpu.memory_space<vmem>>, %arg3: memref<2x8x32xf32, #tpu.memory_space<vmem>>, %arg4: memref<1x1x32xf32, #tpu.memory_space<vmem>>, %arg5: memref<1x1x32xf32, #tpu.memory_space<vmem>>, %arg6: memref<1x32x96xbf16, #tpu.memory_space<vmem>>, %arg7: memref<1x1x96xf32, #tpu.memory_space<vmem>>, %arg8: memref<1x32x32xbf16, #tpu.memory_space<vmem>>, %arg9: memref<1x1x32xf32, #tpu.memory_space<vmem>>, %arg10: memref<1x1x32xf32, #tpu.memory_space<vmem>>, %arg11: memref<1x1x32xf32, #tpu.memory_space<vmem>>, %arg12: memref<1x32x128xbf16, #tpu.memory_space<vmem>>, %arg13: memref<1x1x128xf32, #tpu.memory_space<vmem>>, %arg14: memref<1x128x32xbf16, #tpu.memory_space<vmem>>, %arg15: memref<1x1x32xf32, #tpu.memory_space<vmem>>, %arg16: memref<2x8x32xf32, #tpu.memory_space<vmem>>, %arg17: memref<16x32xf32, #tpu.memory_space<vmem>>, %arg18: memref<2x8x32xbf16, #tpu.memory_space<vmem>>) attributes {dimension_semantics = [#tpu.dimension_semantics<parallel>, #tpu.dimension_semantics<arbitrary>], iteration_bounds = array<i64: 1, 2>, scalar_prefetch = 0 : i64, scratch_operands = 2 : i64, tpu.core_type = #tpu.core_type<tc>, window_params = [{pipeline_mode = #tpu.pipeline_mode<synchronous>, transform_indices = @transform_0, window_bounds = array<i64: 8, 8>}, {pipeline_mode = #tpu.pipeline_mode<synchronous>, transform_indices = @transform_1, window_bounds = array<i64: 2, 8, 32>}, {transform_indices = @transform_2, window_bounds = array<i64: 1, 1, 32>}, {transform_indices = @transform_3, window_bounds = array<i64: 1, 1, 32>}, {transform_indices = @transform_4, window_bounds = array<i64: 1, 32, 96>}, {transform_indices = @transform_5, window_bounds = array<i64: 1, 1, 96>}, {transform_indices = @transform_6, window_bounds = array<i64: 1, 32, 32>}, {transform_indices = @transform_7, window_bounds = array<i64: 1, 1, 32>}, {transform_indices = @transform_8, window_bounds = array<i64: 1, 1, 32>}, {transform_indices = @transform_9, window_bounds = array<i64: 1, 1, 32>}, {transform_indices = @transform_10, window_bounds = array<i64: 1, 32, 128>}, {transform_indices = @transform_11, window_bounds = array<i64: 1, 1, 128>}, {transform_indices = @transform_12, window_bounds = array<i64: 1, 128, 32>}, {transform_indices = @transform_13, window_bounds = array<i64: 1, 1, 32>}, {transform_indices = @transform_14, window_bounds = array<i64: 2, 8, 32>}]} {
    %c0_i32 = arith.constant 0 : i32
    %0 = arith.cmpi eq, %arg1, %c0_i32 : i32
    %1 = arith.extui %0 : i1 to i32
    %c0_i32_0 = arith.constant 0 : i32
    %2 = arith.cmpi ne, %1, %c0_i32_0 : i32
    scf.if %2 {
      %c0_112 = arith.constant 0 : index
      %c0_113 = arith.constant 0 : index
      %c0_114 = arith.constant 0 : index
      %291 = vector.load %arg3[%c0_112, %c0_113, %c0_114] : memref<2x8x32xf32, #tpu.memory_space<vmem>>, vector<2x8x32xf32>
      %292 = vector.shape_cast %291 : vector<2x8x32xf32> to vector<16x32xf32>
      %c0_115 = arith.constant 0 : index
      %c0_116 = arith.constant 0 : index
      %293 = vector.load %arg17[%c0_115, %c0_116] : memref<16x32xf32, #tpu.memory_space<vmem>>, vector<16x32xf32>
      tpu.vector_store %arg17[%c0_115, %c0_116], %292 {strides = array<i32>} : memref<16x32xf32, #tpu.memory_space<vmem>>, vector<16x32xf32>,
    } else {
    }
    %c0 = arith.constant 0 : index
    %c0_1 = arith.constant 0 : index
    %3 = vector.load %arg17[%c0, %c0_1] : memref<16x32xf32, #tpu.memory_space<vmem>>, vector<16x32xf32>
    %c0_2 = arith.constant 0 : index
    %c0_3 = arith.constant 0 : index
    %4 = vector.load %arg2[%c0_2, %c0_3] : memref<8x8xf32, #tpu.memory_space<vmem>>, vector<8x8xf32>
    %c0_4 = arith.constant 0 : index
    %c0_5 = arith.constant 0 : index
    %c0_6 = arith.constant 0 : index
    %5 = vector.load %arg4[%c0_4, %c0_5, %c0_6] : memref<1x1x32xf32, #tpu.memory_space<vmem>>, vector<1x1x32xf32>
    %6 = vector.shape_cast %5 : vector<1x1x32xf32> to vector<1x32xf32>
    %c0_7 = arith.constant 0 : index
    %c0_8 = arith.constant 0 : index
    %c0_9 = arith.constant 0 : index
    %7 = vector.load %arg5[%c0_7, %c0_8, %c0_9] : memref<1x1x32xf32, #tpu.memory_space<vmem>>, vector<1x1x32xf32>
    %8 = vector.shape_cast %7 : vector<1x1x32xf32> to vector<1x32xf32>
    %cst = arith.constant dense<0.000000e+00> : vector<16xf32>
    %9 = vector.multi_reduction <add>, %3, %cst [1] : vector<16x32xf32> to vector<16xf32>
    %10 = vector.shape_cast %9 : vector<16xf32> to vector<16x1xf32>
    %cst_10 = arith.constant 3.200000e+01 : f32
    %11 = vector.broadcast %cst_10 : f32 to vector<16x1xf32>
    %12 = arith.divf %10, %11 : vector<16x1xf32>
    %13 = vector.broadcast %12 : vector<16x1xf32> to vector<16x32xf32>
    %14 = arith.subf %3, %13 : vector<16x32xf32>
    %15 = arith.mulf %14, %14 : vector<16x32xf32>
    %cst_11 = arith.constant dense<0.000000e+00> : vector<16xf32>
    %16 = vector.multi_reduction <add>, %15, %cst_11 [1] : vector<16x32xf32> to vector<16xf32>
    %17 = vector.shape_cast %16 : vector<16xf32> to vector<16x1xf32>
    %cst_12 = arith.constant 3.200000e+01 : f32
    %18 = vector.broadcast %cst_12 : f32 to vector<16x1xf32>
    %19 = arith.divf %17, %18 : vector<16x1xf32>
    %20 = vector.broadcast %12 : vector<16x1xf32> to vector<16x32xf32>
    %21 = arith.subf %3, %20 : vector<16x32xf32>
    %cst_13 = arith.constant 9.99999974E-6 : f32
    %22 = vector.broadcast %cst_13 : f32 to vector<16x1xf32>
    %23 = arith.addf %19, %22 : vector<16x1xf32>
    %24 = math.rsqrt %23 : vector<16x1xf32>
    %25 = vector.broadcast %24 : vector<16x1xf32> to vector<16x32xf32>
    %26 = arith.mulf %21, %25 : vector<16x32xf32>
    %27 = vector.broadcast %6 : vector<1x32xf32> to vector<16x32xf32>
    %28 = arith.mulf %26, %27 : vector<16x32xf32>
    %29 = vector.broadcast %8 : vector<1x32xf32> to vector<16x32xf32>
    %30 = arith.addf %28, %29 : vector<16x32xf32>
    %31 = arith.truncf %30 : vector<16x32xf32> to vector<16x32xbf16>
    %c0_14 = arith.constant 0 : index
    %c0_15 = arith.constant 0 : index
    %c0_16 = arith.constant 0 : index
    %32 = vector.load %arg6[%c0_14, %c0_15, %c0_16] : memref<1x32x96xbf16, #tpu.memory_space<vmem>>, vector<1x32x96xbf16>
    %33 = vector.shape_cast %32 : vector<1x32x96xbf16> to vector<32x96xbf16>
    %cst_17 = arith.constant dense<0.000000e+00> : vector<16x96xf32>
    %34 = tpu.matmul %31, %33, %cst_17 {dimension_numbers = #tpu.dot_dimension_numbers<[1], [0], [0], [1], [0, 0, 1, 1], [], []>} : vector<16x32xbf16>, vector<32x96xbf16>, vector<16x96xf32> -> vector<16x96xf32>
    %c0_18 = arith.constant 0 : index
    %c0_19 = arith.constant 0 : index
    %c0_20 = arith.constant 0 : index
    %35 = vector.load %arg7[%c0_18, %c0_19, %c0_20] : memref<1x1x96xf32, #tpu.memory_space<vmem>>, vector<1x1x96xf32>
    %36 = vector.shape_cast %35 : vector<1x1x96xf32> to vector<1x96xf32>
    %37 = vector.broadcast %36 : vector<1x96xf32> to vector<16x96xf32>
    %38 = arith.addf %34, %37 : vector<16x96xf32>
    %39 = arith.truncf %38 : vector<16x96xf32> to vector<16x96xbf16>
    %40 = vector.extract_strided_slice %39 {offsets = [0, 0], sizes = [8, 96], strides = [1, 1]} : vector<16x96xbf16> to vector<8x96xbf16>
    %41 = vector.extract_strided_slice %40 {offsets = [0, 0], sizes = [8, 8], strides = [1, 1]} : vector<8x96xbf16> to vector<8x8xbf16>
    %cst_21 = arith.constant 3.535160e-01 : bf16
    %42 = vector.broadcast %cst_21 : bf16 to vector<8x8xbf16>
    %43 = arith.mulf %41, %42 : vector<8x8xbf16>
    %44 = vector.extract_strided_slice %40 {offsets = [0, 32], sizes = [8, 8], strides = [1, 1]} : vector<8x96xbf16> to vector<8x8xbf16>
    %45 = vector.extract_strided_slice %40 {offsets = [0, 64], sizes = [8, 8], strides = [1, 1]} : vector<8x96xbf16> to vector<8x8xbf16>
    %46 = tpu.transpose %44, [1, 0] : vector<8x8xbf16> -> vector<8x8xbf16>
    %cst_22 = arith.constant dense<0.000000e+00> : vector<8x8xf32>
    %47 = tpu.matmul %43, %46, %cst_22 {dimension_numbers = #tpu.dot_dimension_numbers<[1], [0], [0], [1], [0, 0, 1, 1], [], []>} : vector<8x8xbf16>, vector<8x8xbf16>, vector<8x8xf32> -> vector<8x8xf32>
    %48 = arith.addf %47, %4 : vector<8x8xf32>
    %cst_23 = arith.constant dense<0xFF800000> : vector<8xf32>
    %49 = vector.multi_reduction <maximumf>, %48, %cst_23 [1] : vector<8x8xf32> to vector<8xf32>
    %50 = vector.shape_cast %49 : vector<8xf32> to vector<8x1xf32>
    %51 = vector.broadcast %50 : vector<8x1xf32> to vector<8x8xf32>
    %52 = arith.subf %48, %51 : vector<8x8xf32>
    %53 = math.exp %52 : vector<8x8xf32>
    %cst_24 = arith.constant dense<0.000000e+00> : vector<8xf32>
    %54 = vector.multi_reduction <add>, %53, %cst_24 [1] : vector<8x8xf32> to vector<8xf32>
    %55 = vector.shape_cast %54 : vector<8xf32> to vector<8x1xf32>
    %56 = tpu.reciprocal %55 {approx = true} : vector<8x1xf32> -> vector<8x1xf32>
    %57 = vector.broadcast %56 : vector<8x1xf32> to vector<8x8xf32>
    %58 = arith.mulf %53, %57 : vector<8x8xf32>
    %59 = arith.truncf %58 : vector<8x8xf32> to vector<8x8xbf16>
    %cst_25 = arith.constant dense<0.000000e+00> : vector<8x8xf32>
    %60 = tpu.matmul %59, %45, %cst_25 {dimension_numbers = #tpu.dot_dimension_numbers<[1], [0], [0], [1], [0, 0, 1, 1], [], []>} : vector<8x8xbf16>, vector<8x8xbf16>, vector<8x8xf32> -> vector<8x8xf32>
    %61 = arith.truncf %60 : vector<8x8xf32> to vector<8x8xbf16>
    %62 = vector.extract_strided_slice %40 {offsets = [0, 8], sizes = [8, 8], strides = [1, 1]} : vector<8x96xbf16> to vector<8x8xbf16>
    %cst_26 = arith.constant 3.535160e-01 : bf16
    %63 = vector.broadcast %cst_26 : bf16 to vector<8x8xbf16>
    %64 = arith.mulf %62, %63 : vector<8x8xbf16>
    %65 = vector.extract_strided_slice %40 {offsets = [0, 40], sizes = [8, 8], strides = [1, 1]} : vector<8x96xbf16> to vector<8x8xbf16>
    %66 = vector.extract_strided_slice %40 {offsets = [0, 72], sizes = [8, 8], strides = [1, 1]} : vector<8x96xbf16> to vector<8x8xbf16>
    %67 = tpu.transpose %65, [1, 0] : vector<8x8xbf16> -> vector<8x8xbf16>
    %cst_27 = arith.constant dense<0.000000e+00> : vector<8x8xf32>
    %68 = tpu.matmul %64, %67, %cst_27 {dimension_numbers = #tpu.dot_dimension_numbers<[1], [0], [0], [1], [0, 0, 1, 1], [], []>} : vector<8x8xbf16>, vector<8x8xbf16>, vector<8x8xf32> -> vector<8x8xf32>
    %69 = arith.addf %68, %4 : vector<8x8xf32>
    %cst_28 = arith.constant dense<0xFF800000> : vector<8xf32>
    %70 = vector.multi_reduction <maximumf>, %69, %cst_28 [1] : vector<8x8xf32> to vector<8xf32>
    %71 = vector.shape_cast %70 : vector<8xf32> to vector<8x1xf32>
    %72 = vector.broadcast %71 : vector<8x1xf32> to vector<8x8xf32>
    %73 = arith.subf %69, %72 : vector<8x8xf32>
    %74 = math.exp %73 : vector<8x8xf32>
    %cst_29 = arith.constant dense<0.000000e+00> : vector<8xf32>
    %75 = vector.multi_reduction <add>, %74, %cst_29 [1] : vector<8x8xf32> to vector<8xf32>
    %76 = vector.shape_cast %75 : vector<8xf32> to vector<8x1xf32>
    %77 = tpu.reciprocal %76 {approx = true} : vector<8x1xf32> -> vector<8x1xf32>
    %78 = vector.broadcast %77 : vector<8x1xf32> to vector<8x8xf32>
    %79 = arith.mulf %74, %78 : vector<8x8xf32>
    %80 = arith.truncf %79 : vector<8x8xf32> to vector<8x8xbf16>
    %cst_30 = arith.constant dense<0.000000e+00> : vector<8x8xf32>
    %81 = tpu.matmul %80, %66, %cst_30 {dimension_numbers = #tpu.dot_dimension_numbers<[1], [0], [0], [1], [0, 0, 1, 1], [], []>} : vector<8x8xbf16>, vector<8x8xbf16>, vector<8x8xf32> -> vector<8x8xf32>
    %82 = arith.truncf %81 : vector<8x8xf32> to vector<8x8xbf16>
    %83 = vector.extract_strided_slice %40 {offsets = [0, 16], sizes = [8, 8], strides = [1, 1]} : vector<8x96xbf16> to vector<8x8xbf16>
    %cst_31 = arith.constant 3.535160e-01 : bf16
    %84 = vector.broadcast %cst_31 : bf16 to vector<8x8xbf16>
    %85 = arith.mulf %83, %84 : vector<8x8xbf16>
    %86 = vector.extract_strided_slice %40 {offsets = [0, 48], sizes = [8, 8], strides = [1, 1]} : vector<8x96xbf16> to vector<8x8xbf16>
    %87 = vector.extract_strided_slice %40 {offsets = [0, 80], sizes = [8, 8], strides = [1, 1]} : vector<8x96xbf16> to vector<8x8xbf16>
    %88 = tpu.transpose %86, [1, 0] : vector<8x8xbf16> -> vector<8x8xbf16>
    %cst_32 = arith.constant dense<0.000000e+00> : vector<8x8xf32>
    %89 = tpu.matmul %85, %88, %cst_32 {dimension_numbers = #tpu.dot_dimension_numbers<[1], [0], [0], [1], [0, 0, 1, 1], [], []>} : vector<8x8xbf16>, vector<8x8xbf16>, vector<8x8xf32> -> vector<8x8xf32>
    %90 = arith.addf %89, %4 : vector<8x8xf32>
    %cst_33 = arith.constant dense<0xFF800000> : vector<8xf32>
    %91 = vector.multi_reduction <maximumf>, %90, %cst_33 [1] : vector<8x8xf32> to vector<8xf32>
    %92 = vector.shape_cast %91 : vector<8xf32> to vector<8x1xf32>
    %93 = vector.broadcast %92 : vector<8x1xf32> to vector<8x8xf32>
    %94 = arith.subf %90, %93 : vector<8x8xf32>
    %95 = math.exp %94 : vector<8x8xf32>
    %cst_34 = arith.constant dense<0.000000e+00> : vector<8xf32>
    %96 = vector.multi_reduction <add>, %95, %cst_34 [1] : vector<8x8xf32> to vector<8xf32>
    %97 = vector.shape_cast %96 : vector<8xf32> to vector<8x1xf32>
    %98 = tpu.reciprocal %97 {approx = true} : vector<8x1xf32> -> vector<8x1xf32>
    %99 = vector.broadcast %98 : vector<8x1xf32> to vector<8x8xf32>
    %100 = arith.mulf %95, %99 : vector<8x8xf32>
    %101 = arith.truncf %100 : vector<8x8xf32> to vector<8x8xbf16>
    %cst_35 = arith.constant dense<0.000000e+00> : vector<8x8xf32>
    %102 = tpu.matmul %101, %87, %cst_35 {dimension_numbers = #tpu.dot_dimension_numbers<[1], [0], [0], [1], [0, 0, 1, 1], [], []>} : vector<8x8xbf16>, vector<8x8xbf16>, vector<8x8xf32> -> vector<8x8xf32>
    %103 = arith.truncf %102 : vector<8x8xf32> to vector<8x8xbf16>
    %104 = vector.extract_strided_slice %40 {offsets = [0, 24], sizes = [8, 8], strides = [1, 1]} : vector<8x96xbf16> to vector<8x8xbf16>
    %cst_36 = arith.constant 3.535160e-01 : bf16
    %105 = vector.broadcast %cst_36 : bf16 to vector<8x8xbf16>
    %106 = arith.mulf %104, %105 : vector<8x8xbf16>
    %107 = vector.extract_strided_slice %40 {offsets = [0, 56], sizes = [8, 8], strides = [1, 1]} : vector<8x96xbf16> to vector<8x8xbf16>
    %108 = vector.extract_strided_slice %40 {offsets = [0, 88], sizes = [8, 8], strides = [1, 1]} : vector<8x96xbf16> to vector<8x8xbf16>
    %109 = tpu.transpose %107, [1, 0] : vector<8x8xbf16> -> vector<8x8xbf16>
    %cst_37 = arith.constant dense<0.000000e+00> : vector<8x8xf32>
    %110 = tpu.matmul %106, %109, %cst_37 {dimension_numbers = #tpu.dot_dimension_numbers<[1], [0], [0], [1], [0, 0, 1, 1], [], []>} : vector<8x8xbf16>, vector<8x8xbf16>, vector<8x8xf32> -> vector<8x8xf32>
    %111 = arith.addf %110, %4 : vector<8x8xf32>
    %cst_38 = arith.constant dense<0xFF800000> : vector<8xf32>
    %112 = vector.multi_reduction <maximumf>, %111, %cst_38 [1] : vector<8x8xf32> to vector<8xf32>
    %113 = vector.shape_cast %112 : vector<8xf32> to vector<8x1xf32>
    %114 = vector.broadcast %113 : vector<8x1xf32> to vector<8x8xf32>
    %115 = arith.subf %111, %114 : vector<8x8xf32>
    %116 = math.exp %115 : vector<8x8xf32>
    %cst_39 = arith.constant dense<0.000000e+00> : vector<8xf32>
    %117 = vector.multi_reduction <add>, %116, %cst_39 [1] : vector<8x8xf32> to vector<8xf32>
    %118 = vector.shape_cast %117 : vector<8xf32> to vector<8x1xf32>
    %119 = tpu.reciprocal %118 {approx = true} : vector<8x1xf32> -> vector<8x1xf32>
    %120 = vector.broadcast %119 : vector<8x1xf32> to vector<8x8xf32>
    %121 = arith.mulf %116, %120 : vector<8x8xf32>
    %122 = arith.truncf %121 : vector<8x8xf32> to vector<8x8xbf16>
    %cst_40 = arith.constant dense<0.000000e+00> : vector<8x8xf32>
    %123 = tpu.matmul %122, %108, %cst_40 {dimension_numbers = #tpu.dot_dimension_numbers<[1], [0], [0], [1], [0, 0, 1, 1], [], []>} : vector<8x8xbf16>, vector<8x8xbf16>, vector<8x8xf32> -> vector<8x8xf32>
    %124 = arith.truncf %123 : vector<8x8xf32> to vector<8x8xbf16>
    %125 = tpu.concatenate %61, %82, %103, %124 in 1 : vector<8x8xbf16>, vector<8x8xbf16>, vector<8x8xbf16>, vector<8x8xbf16> -> vector<8x32xbf16>
    %c0_41 = arith.constant 0 : index
    %c0_42 = arith.constant 0 : index
    %c0_43 = arith.constant 0 : index
    %126 = vector.load %arg18[%c0_41, %c0_42, %c0_43] : memref<2x8x32xbf16, #tpu.memory_space<vmem>>, vector<1x8x32xbf16>
    %127 = vector.shape_cast %126 : vector<1x8x32xbf16> to vector<8x32xbf16>
    %128 = vector.shape_cast %125 : vector<8x32xbf16> to vector<1x8x32xbf16>
    tpu.vector_store %arg18[%c0_41, %c0_42, %c0_43], %128 {strides = array<i32>} : memref<2x8x32xbf16, #tpu.memory_space<vmem>>, vector<1x8x32xbf16>,
    %129 = vector.extract_strided_slice %39 {offsets = [8, 0], sizes = [8, 96], strides = [1, 1]} : vector<16x96xbf16> to vector<8x96xbf16>
    %130 = vector.extract_strided_slice %129 {offsets = [0, 0], sizes = [8, 8], strides = [1, 1]} : vector<8x96xbf16> to vector<8x8xbf16>
    %cst_44 = arith.constant 3.535160e-01 : bf16
    %131 = vector.broadcast %cst_44 : bf16 to vector<8x8xbf16>
    %132 = arith.mulf %130, %131 : vector<8x8xbf16>
    %133 = vector.extract_strided_slice %129 {offsets = [0, 32], sizes = [8, 8], strides = [1, 1]} : vector<8x96xbf16> to vector<8x8xbf16>
    %134 = vector.extract_strided_slice %129 {offsets = [0, 64], sizes = [8, 8], strides = [1, 1]} : vector<8x96xbf16> to vector<8x8xbf16>
    %135 = tpu.transpose %133, [1, 0] : vector<8x8xbf16> -> vector<8x8xbf16>
    %cst_45 = arith.constant dense<0.000000e+00> : vector<8x8xf32>
    %136 = tpu.matmul %132, %135, %cst_45 {dimension_numbers = #tpu.dot_dimension_numbers<[1], [0], [0], [1], [0, 0, 1, 1], [], []>} : vector<8x8xbf16>, vector<8x8xbf16>, vector<8x8xf32> -> vector<8x8xf32>
    %137 = arith.addf %136, %4 : vector<8x8xf32>
    %cst_46 = arith.constant dense<0xFF800000> : vector<8xf32>
    %138 = vector.multi_reduction <maximumf>, %137, %cst_46 [1] : vector<8x8xf32> to vector<8xf32>
    %139 = vector.shape_cast %138 : vector<8xf32> to vector<8x1xf32>
    %140 = vector.broadcast %139 : vector<8x1xf32> to vector<8x8xf32>
    %141 = arith.subf %137, %140 : vector<8x8xf32>
    %142 = math.exp %141 : vector<8x8xf32>
    %cst_47 = arith.constant dense<0.000000e+00> : vector<8xf32>
    %143 = vector.multi_reduction <add>, %142, %cst_47 [1] : vector<8x8xf32> to vector<8xf32>
    %144 = vector.shape_cast %143 : vector<8xf32> to vector<8x1xf32>
    %145 = tpu.reciprocal %144 {approx = true} : vector<8x1xf32> -> vector<8x1xf32>
    %146 = vector.broadcast %145 : vector<8x1xf32> to vector<8x8xf32>
    %147 = arith.mulf %142, %146 : vector<8x8xf32>
    %148 = arith.truncf %147 : vector<8x8xf32> to vector<8x8xbf16>
    %cst_48 = arith.constant dense<0.000000e+00> : vector<8x8xf32>
    %149 = tpu.matmul %148, %134, %cst_48 {dimension_numbers = #tpu.dot_dimension_numbers<[1], [0], [0], [1], [0, 0, 1, 1], [], []>} : vector<8x8xbf16>, vector<8x8xbf16>, vector<8x8xf32> -> vector<8x8xf32>
    %150 = arith.truncf %149 : vector<8x8xf32> to vector<8x8xbf16>
    %151 = vector.extract_strided_slice %129 {offsets = [0, 8], sizes = [8, 8], strides = [1, 1]} : vector<8x96xbf16> to vector<8x8xbf16>
    %cst_49 = arith.constant 3.535160e-01 : bf16
    %152 = vector.broadcast %cst_49 : bf16 to vector<8x8xbf16>
    %153 = arith.mulf %151, %152 : vector<8x8xbf16>
    %154 = vector.extract_strided_slice %129 {offsets = [0, 40], sizes = [8, 8], strides = [1, 1]} : vector<8x96xbf16> to vector<8x8xbf16>
    %155 = vector.extract_strided_slice %129 {offsets = [0, 72], sizes = [8, 8], strides = [1, 1]} : vector<8x96xbf16> to vector<8x8xbf16>
    %156 = tpu.transpose %154, [1, 0] : vector<8x8xbf16> -> vector<8x8xbf16>
    %cst_50 = arith.constant dense<0.000000e+00> : vector<8x8xf32>
    %157 = tpu.matmul %153, %156, %cst_50 {dimension_numbers = #tpu.dot_dimension_numbers<[1], [0], [0], [1], [0, 0, 1, 1], [], []>} : vector<8x8xbf16>, vector<8x8xbf16>, vector<8x8xf32> -> vector<8x8xf32>
    %158 = arith.addf %157, %4 : vector<8x8xf32>
    %cst_51 = arith.constant dense<0xFF800000> : vector<8xf32>
    %159 = vector.multi_reduction <maximumf>, %158, %cst_51 [1] : vector<8x8xf32> to vector<8xf32>
    %160 = vector.shape_cast %159 : vector<8xf32> to vector<8x1xf32>
    %161 = vector.broadcast %160 : vector<8x1xf32> to vector<8x8xf32>
    %162 = arith.subf %158, %161 : vector<8x8xf32>
    %163 = math.exp %162 : vector<8x8xf32>
    %cst_52 = arith.constant dense<0.000000e+00> : vector<8xf32>
    %164 = vector.multi_reduction <add>, %163, %cst_52 [1] : vector<8x8xf32> to vector<8xf32>
    %165 = vector.shape_cast %164 : vector<8xf32> to vector<8x1xf32>
    %166 = tpu.reciprocal %165 {approx = true} : vector<8x1xf32> -> vector<8x1xf32>
    %167 = vector.broadcast %166 : vector<8x1xf32> to vector<8x8xf32>
    %168 = arith.mulf %163, %167 : vector<8x8xf32>
    %169 = arith.truncf %168 : vector<8x8xf32> to vector<8x8xbf16>
    %cst_53 = arith.constant dense<0.000000e+00> : vector<8x8xf32>
    %170 = tpu.matmul %169, %155, %cst_53 {dimension_numbers = #tpu.dot_dimension_numbers<[1], [0], [0], [1], [0, 0, 1, 1], [], []>} : vector<8x8xbf16>, vector<8x8xbf16>, vector<8x8xf32> -> vector<8x8xf32>
    %171 = arith.truncf %170 : vector<8x8xf32> to vector<8x8xbf16>
    %172 = vector.extract_strided_slice %129 {offsets = [0, 16], sizes = [8, 8], strides = [1, 1]} : vector<8x96xbf16> to vector<8x8xbf16>
    %cst_54 = arith.constant 3.535160e-01 : bf16
    %173 = vector.broadcast %cst_54 : bf16 to vector<8x8xbf16>
    %174 = arith.mulf %172, %173 : vector<8x8xbf16>
    %175 = vector.extract_strided_slice %129 {offsets = [0, 48], sizes = [8, 8], strides = [1, 1]} : vector<8x96xbf16> to vector<8x8xbf16>
    %176 = vector.extract_strided_slice %129 {offsets = [0, 80], sizes = [8, 8], strides = [1, 1]} : vector<8x96xbf16> to vector<8x8xbf16>
    %177 = tpu.transpose %175, [1, 0] : vector<8x8xbf16> -> vector<8x8xbf16>
    %cst_55 = arith.constant dense<0.000000e+00> : vector<8x8xf32>
    %178 = tpu.matmul %174, %177, %cst_55 {dimension_numbers = #tpu.dot_dimension_numbers<[1], [0], [0], [1], [0, 0, 1, 1], [], []>} : vector<8x8xbf16>, vector<8x8xbf16>, vector<8x8xf32> -> vector<8x8xf32>
    %179 = arith.addf %178, %4 : vector<8x8xf32>
    %cst_56 = arith.constant dense<0xFF800000> : vector<8xf32>
    %180 = vector.multi_reduction <maximumf>, %179, %cst_56 [1] : vector<8x8xf32> to vector<8xf32>
    %181 = vector.shape_cast %180 : vector<8xf32> to vector<8x1xf32>
    %182 = vector.broadcast %181 : vector<8x1xf32> to vector<8x8xf32>
    %183 = arith.subf %179, %182 : vector<8x8xf32>
    %184 = math.exp %183 : vector<8x8xf32>
    %cst_57 = arith.constant dense<0.000000e+00> : vector<8xf32>
    %185 = vector.multi_reduction <add>, %184, %cst_57 [1] : vector<8x8xf32> to vector<8xf32>
    %186 = vector.shape_cast %185 : vector<8xf32> to vector<8x1xf32>
    %187 = tpu.reciprocal %186 {approx = true} : vector<8x1xf32> -> vector<8x1xf32>
    %188 = vector.broadcast %187 : vector<8x1xf32> to vector<8x8xf32>
    %189 = arith.mulf %184, %188 : vector<8x8xf32>
    %190 = arith.truncf %189 : vector<8x8xf32> to vector<8x8xbf16>
    %cst_58 = arith.constant dense<0.000000e+00> : vector<8x8xf32>
    %191 = tpu.matmul %190, %176, %cst_58 {dimension_numbers = #tpu.dot_dimension_numbers<[1], [0], [0], [1], [0, 0, 1, 1], [], []>} : vector<8x8xbf16>, vector<8x8xbf16>, vector<8x8xf32> -> vector<8x8xf32>
    %192 = arith.truncf %191 : vector<8x8xf32> to vector<8x8xbf16>
    %193 = vector.extract_strided_slice %129 {offsets = [0, 24], sizes = [8, 8], strides = [1, 1]} : vector<8x96xbf16> to vector<8x8xbf16>
    %cst_59 = arith.constant 3.535160e-01 : bf16
    %194 = vector.broadcast %cst_59 : bf16 to vector<8x8xbf16>
    %195 = arith.mulf %193, %194 : vector<8x8xbf16>
    %196 = vector.extract_strided_slice %129 {offsets = [0, 56], sizes = [8, 8], strides = [1, 1]} : vector<8x96xbf16> to vector<8x8xbf16>
    %197 = vector.extract_strided_slice %129 {offsets = [0, 88], sizes = [8, 8], strides = [1, 1]} : vector<8x96xbf16> to vector<8x8xbf16>
    %198 = tpu.transpose %196, [1, 0] : vector<8x8xbf16> -> vector<8x8xbf16>
    %cst_60 = arith.constant dense<0.000000e+00> : vector<8x8xf32>
    %199 = tpu.matmul %195, %198, %cst_60 {dimension_numbers = #tpu.dot_dimension_numbers<[1], [0], [0], [1], [0, 0, 1, 1], [], []>} : vector<8x8xbf16>, vector<8x8xbf16>, vector<8x8xf32> -> vector<8x8xf32>
    %200 = arith.addf %199, %4 : vector<8x8xf32>
    %cst_61 = arith.constant dense<0xFF800000> : vector<8xf32>
    %201 = vector.multi_reduction <maximumf>, %200, %cst_61 [1] : vector<8x8xf32> to vector<8xf32>
    %202 = vector.shape_cast %201 : vector<8xf32> to vector<8x1xf32>
    %203 = vector.broadcast %202 : vector<8x1xf32> to vector<8x8xf32>
    %204 = arith.subf %200, %203 : vector<8x8xf32>
    %205 = math.exp %204 : vector<8x8xf32>
    %cst_62 = arith.constant dense<0.000000e+00> : vector<8xf32>
    %206 = vector.multi_reduction <add>, %205, %cst_62 [1] : vector<8x8xf32> to vector<8xf32>
    %207 = vector.shape_cast %206 : vector<8xf32> to vector<8x1xf32>
    %208 = tpu.reciprocal %207 {approx = true} : vector<8x1xf32> -> vector<8x1xf32>
    %209 = vector.broadcast %208 : vector<8x1xf32> to vector<8x8xf32>
    %210 = arith.mulf %205, %209 : vector<8x8xf32>
    %211 = arith.truncf %210 : vector<8x8xf32> to vector<8x8xbf16>
    %cst_63 = arith.constant dense<0.000000e+00> : vector<8x8xf32>
    %212 = tpu.matmul %211, %197, %cst_63 {dimension_numbers = #tpu.dot_dimension_numbers<[1], [0], [0], [1], [0, 0, 1, 1], [], []>} : vector<8x8xbf16>, vector<8x8xbf16>, vector<8x8xf32> -> vector<8x8xf32>
    %213 = arith.truncf %212 : vector<8x8xf32> to vector<8x8xbf16>
    %214 = tpu.concatenate %150, %171, %192, %213 in 1 : vector<8x8xbf16>, vector<8x8xbf16>, vector<8x8xbf16>, vector<8x8xbf16> -> vector<8x32xbf16>
    %c1 = arith.constant 1 : index
    %c0_64 = arith.constant 0 : index
    %c0_65 = arith.constant 0 : index
    %215 = vector.load %arg18[%c1, %c0_64, %c0_65] : memref<2x8x32xbf16, #tpu.memory_space<vmem>>, vector<1x8x32xbf16>
    %216 = vector.shape_cast %215 : vector<1x8x32xbf16> to vector<8x32xbf16>
    %217 = vector.shape_cast %214 : vector<8x32xbf16> to vector<1x8x32xbf16>
    tpu.vector_store %arg18[%c1, %c0_64, %c0_65], %217 {strides = array<i32>} : memref<2x8x32xbf16, #tpu.memory_space<vmem>>, vector<1x8x32xbf16>,
    %c0_66 = arith.constant 0 : index
    %c0_67 = arith.constant 0 : index
    %c0_68 = arith.constant 0 : index
    %218 = vector.load %arg18[%c0_66, %c0_67, %c0_68] : memref<2x8x32xbf16, #tpu.memory_space<vmem>>, vector<2x8x32xbf16>
    %219 = vector.shape_cast %218 : vector<2x8x32xbf16> to vector<16x32xbf16>
    %c0_69 = arith.constant 0 : index
    %c0_70 = arith.constant 0 : index
    %c0_71 = arith.constant 0 : index
    %220 = vector.load %arg8[%c0_69, %c0_70, %c0_71] : memref<1x32x32xbf16, #tpu.memory_space<vmem>>, vector<1x32x32xbf16>
    %221 = vector.shape_cast %220 : vector<1x32x32xbf16> to vector<32x32xbf16>
    %cst_72 = arith.constant dense<0.000000e+00> : vector<16x32xf32>
    %222 = tpu.matmul %219, %221, %cst_72 {dimension_numbers = #tpu.dot_dimension_numbers<[1], [0], [0], [1], [0, 0, 1, 1], [], []>} : vector<16x32xbf16>, vector<32x32xbf16>, vector<16x32xf32> -> vector<16x32xf32>
    %c0_73 = arith.constant 0 : index
    %c0_74 = arith.constant 0 : index
    %c0_75 = arith.constant 0 : index
    %223 = vector.load %arg9[%c0_73, %c0_74, %c0_75] : memref<1x1x32xf32, #tpu.memory_space<vmem>>, vector<1x1x32xf32>
    %224 = vector.shape_cast %223 : vector<1x1x32xf32> to vector<1x32xf32>
    %225 = vector.broadcast %224 : vector<1x32xf32> to vector<16x32xf32>
    %226 = arith.addf %222, %225 : vector<16x32xf32>
    %227 = arith.addf %3, %226 : vector<16x32xf32>
    %c0_76 = arith.constant 0 : index
    %c0_77 = arith.constant 0 : index
    %228 = vector.load %arg17[%c0_76, %c0_77] : memref<16x32xf32, #tpu.memory_space<vmem>>, vector<16x32xf32>
    tpu.vector_store %arg17[%c0_76, %c0_77], %227 {strides = array<i32>} : memref<16x32xf32, #tpu.memory_space<vmem>>, vector<16x32xf32>,
    %c0_78 = arith.constant 0 : index
    %c0_79 = arith.constant 0 : index
    %c0_80 = arith.constant 0 : index
    %229 = vector.load %arg10[%c0_78, %c0_79, %c0_80] : memref<1x1x32xf32, #tpu.memory_space<vmem>>, vector<1x1x32xf32>
    %230 = vector.shape_cast %229 : vector<1x1x32xf32> to vector<1x32xf32>
    %c0_81 = arith.constant 0 : index
    %c0_82 = arith.constant 0 : index
    %c0_83 = arith.constant 0 : index
    %231 = vector.load %arg11[%c0_81, %c0_82, %c0_83] : memref<1x1x32xf32, #tpu.memory_space<vmem>>, vector<1x1x32xf32>
    %232 = vector.shape_cast %231 : vector<1x1x32xf32> to vector<1x32xf32>
    %c0_84 = arith.constant 0 : index
    %c0_85 = arith.constant 0 : index
    %c0_86 = arith.constant 0 : index
    %233 = vector.load %arg12[%c0_84, %c0_85, %c0_86] : memref<1x32x128xbf16, #tpu.memory_space<vmem>>, vector<1x32x128xbf16>
    %234 = vector.shape_cast %233 : vector<1x32x128xbf16> to vector<32x128xbf16>
    %c0_87 = arith.constant 0 : index
    %c0_88 = arith.constant 0 : index
    %c0_89 = arith.constant 0 : index
    %235 = vector.load %arg13[%c0_87, %c0_88, %c0_89] : memref<1x1x128xf32, #tpu.memory_space<vmem>>, vector<1x1x128xf32>
    %236 = vector.shape_cast %235 : vector<1x1x128xf32> to vector<1x128xf32>
    %c0_90 = arith.constant 0 : index
    %c0_91 = arith.constant 0 : index
    %c0_92 = arith.constant 0 : index
    %237 = vector.load %arg14[%c0_90, %c0_91, %c0_92] : memref<1x128x32xbf16, #tpu.memory_space<vmem>>, vector<1x128x32xbf16>
    %238 = vector.shape_cast %237 : vector<1x128x32xbf16> to vector<128x32xbf16>
    %c0_93 = arith.constant 0 : index
    %c0_94 = arith.constant 0 : index
    %c0_95 = arith.constant 0 : index
    %239 = vector.load %arg15[%c0_93, %c0_94, %c0_95] : memref<1x1x32xf32, #tpu.memory_space<vmem>>, vector<1x1x32xf32>
    %240 = vector.shape_cast %239 : vector<1x1x32xf32> to vector<1x32xf32>
    %c0_i32_96 = arith.constant 0 : i32
    %c1_i32 = arith.constant 1 : i32
    %241 = arith.muli %c0_i32_96, %c1_i32 : i32
    %c0_i32_97 = arith.constant 0 : i32
    %242 = arith.addi %c0_i32_97, %241 : i32
    %c16_i32 = arith.constant 16 : i32
    %243 = arith.muli %242, %c16_i32 : i32
    %244 = tpu.assume_multiple %243, 16 : i32
    %245 = arith.index_cast %244 : i32 to index
    %c0_98 = arith.constant 0 : index
    %246 = vector.load %arg17[%245, %c0_98] : memref<16x32xf32, #tpu.memory_space<vmem>>, vector<16x32xf32>
    %cst_99 = arith.constant dense<0.000000e+00> : vector<16xf32>
    %247 = vector.multi_reduction <add>, %246, %cst_99 [1] : vector<16x32xf32> to vector<16xf32>
    %248 = vector.shape_cast %247 : vector<16xf32> to vector<16x1xf32>
    %cst_100 = arith.constant 3.200000e+01 : f32
    %249 = vector.broadcast %cst_100 : f32 to vector<16x1xf32>
    %250 = arith.divf %248, %249 : vector<16x1xf32>
    %251 = vector.broadcast %250 : vector<16x1xf32> to vector<16x32xf32>
    %252 = arith.subf %246, %251 : vector<16x32xf32>
    %253 = arith.mulf %252, %252 : vector<16x32xf32>
    %cst_101 = arith.constant dense<0.000000e+00> : vector<16xf32>
    %254 = vector.multi_reduction <add>, %253, %cst_101 [1] : vector<16x32xf32> to vector<16xf32>
    %255 = vector.shape_cast %254 : vector<16xf32> to vector<16x1xf32>
    %cst_102 = arith.constant 3.200000e+01 : f32
    %256 = vector.broadcast %cst_102 : f32 to vector<16x1xf32>
    %257 = arith.divf %255, %256 : vector<16x1xf32>
    %258 = vector.broadcast %250 : vector<16x1xf32> to vector<16x32xf32>
    %259 = arith.subf %246, %258 : vector<16x32xf32>
    %cst_103 = arith.constant 9.99999974E-6 : f32
    %260 = vector.broadcast %cst_103 : f32 to vector<16x1xf32>
    %261 = arith.addf %257, %260 : vector<16x1xf32>
    %262 = math.rsqrt %261 : vector<16x1xf32>
    %263 = vector.broadcast %262 : vector<16x1xf32> to vector<16x32xf32>
    %264 = arith.mulf %259, %263 : vector<16x32xf32>
    %265 = vector.broadcast %230 : vector<1x32xf32> to vector<16x32xf32>
    %266 = arith.mulf %264, %265 : vector<16x32xf32>
    %267 = vector.broadcast %232 : vector<1x32xf32> to vector<16x32xf32>
    %268 = arith.addf %266, %267 : vector<16x32xf32>
    %269 = arith.truncf %268 : vector<16x32xf32> to vector<16x32xbf16>
    %cst_104 = arith.constant dense<0.000000e+00> : vector<16x128xf32>
    %270 = tpu.matmul %269, %234, %cst_104 {dimension_numbers = #tpu.dot_dimension_numbers<[1], [0], [0], [1], [0, 0, 1, 1], [], []>} : vector<16x32xbf16>, vector<32x128xbf16>, vector<16x128xf32> -> vector<16x128xf32>
    %271 = vector.broadcast %236 : vector<1x128xf32> to vector<16x128xf32>
    %272 = arith.addf %270, %271 : vector<16x128xf32>
    %cst_105 = arith.constant 1.702000e+00 : f32
    %273 = vector.broadcast %cst_105 : f32 to vector<16x128xf32>
    %274 = arith.mulf %273, %272 : vector<16x128xf32>
    %275 = arith.negf %274 : vector<16x128xf32>
    %276 = math.exp %275 : vector<16x128xf32>
    %cst_106 = arith.constant 1.000000e+00 : f32
    %277 = vector.broadcast %cst_106 : f32 to vector<16x128xf32>
    %278 = arith.addf %277, %276 : vector<16x128xf32>
    %279 = arith.divf %277, %278 : vector<16x128xf32>
    %280 = arith.mulf %279, %272 : vector<16x128xf32>
    %281 = arith.truncf %280 : vector<16x128xf32> to vector<16x128xbf16>
    %cst_107 = arith.constant dense<0.000000e+00> : vector<16x32xf32>
    %282 = tpu.matmul %281, %238, %cst_107 {dimension_numbers = #tpu.dot_dimension_numbers<[1], [0], [0], [1], [0, 0, 1, 1], [], []>} : vector<16x128xbf16>, vector<128x32xbf16>, vector<16x32xf32> -> vector<16x32xf32>
    %283 = vector.broadcast %240 : vector<1x32xf32> to vector<16x32xf32>
    %284 = arith.addf %282, %283 : vector<16x32xf32>
    %285 = arith.addf %246, %284 : vector<16x32xf32>
    %286 = arith.index_cast %244 : i32 to index
    %c0_108 = arith.constant 0 : index
    %287 = vector.load %arg17[%286, %c0_108] : memref<16x32xf32, #tpu.memory_space<vmem>>, vector<16x32xf32>
    tpu.vector_store %arg17[%286, %c0_108], %285 {strides = array<i32>} : memref<16x32xf32, #tpu.memory_space<vmem>>, vector<16x32xf32>,
    %c1_i32_109 = arith.constant 1 : i32
    %c1_i32_110 = arith.constant 1 : i32
    %288 = arith.cmpi eq, %arg1, %c1_i32_110 : i32
    %289 = arith.extui %288 : i1 to i32
    %c0_i32_111 = arith.constant 0 : i32
    %290 = arith.cmpi ne, %289, %c0_i32_111 : i32
    scf.if %290 {
      %c0_112 = arith.constant 0 : index
      %c0_113 = arith.constant 0 : index
      %291 = vector.load %arg17[%c0_112, %c0_113] : memref<16x32xf32, #tpu.memory_space<vmem>>, vector<16x32xf32>
      %292 = vector.shape_cast %291 : vector<16x32xf32> to vector<2x8x32xf32>
      %c0_114 = arith.constant 0 : index
      %c0_115 = arith.constant 0 : index
      %c0_116 = arith.constant 0 : index
      %293 = vector.load %arg16[%c0_114, %c0_115, %c0_116] : memref<2x8x32xf32, #tpu.memory_space<vmem>>, vector<2x8x32xf32>
      tpu.vector_store %arg16[%c0_114, %c0_115, %c0_116], %292 {strides = array<i32>} : memref<2x8x32xf32, #tpu.memory_space<vmem>>, vector<2x8x32xf32>,
    } else {
    }
    return
  }
  func.func @transform_0(%arg0: i32, %arg1: i32) -> (i32, i32) {
    %c0_i32 = arith.constant 0 : i32
    %c0_i32_0 = arith.constant 0 : i32
    %c0_i32_1 = arith.constant 0 : i32
    return %c0_i32, %c0_i32_0 : i32, i32
  }
  func.func @transform_1(%arg0: i32, %arg1: i32) -> (i32, i32, i32) {
    %c0_i32 = arith.constant 0 : i32
    %c0_i32_0 = arith.constant 0 : i32
    %c0_i32_1 = arith.constant 0 : i32
    return %arg0, %c0_i32, %c0_i32_0 : i32, i32, i32
  }
  func.func @transform_2(%arg0: i32, %arg1: i32) -> (i32, i32, i32) {
    %c0_i32 = arith.constant 0 : i32
    %c0_i32_0 = arith.constant 0 : i32
    %c0_i32_1 = arith.constant 0 : i32
    return %arg1, %c0_i32, %c0_i32_0 : i32, i32, i32
  }
  func.func @transform_3(%arg0: i32, %arg1: i32) -> (i32, i32, i32) {
    %c0_i32 = arith.constant 0 : i32
    %c0_i32_0 = arith.constant 0 : i32
    %c0_i32_1 = arith.constant 0 : i32
    return %arg1, %c0_i32, %c0_i32_0 : i32, i32, i32
  }
  func.func @transform_4(%arg0: i32, %arg1: i32) -> (i32, i32, i32) {
    %c0_i32 = arith.constant 0 : i32
    %c0_i32_0 = arith.constant 0 : i32
    %c0_i32_1 = arith.constant 0 : i32
    return %arg1, %c0_i32, %c0_i32_0 : i32, i32, i32
  }
  func.func @transform_5(%arg0: i32, %arg1: i32) -> (i32, i32, i32) {
    %c0_i32 = arith.constant 0 : i32
    %c0_i32_0 = arith.constant 0 : i32
    %c0_i32_1 = arith.constant 0 : i32
    return %arg1, %c0_i32, %c0_i32_0 : i32, i32, i32
  }
  func.func @transform_6(%arg0: i32, %arg1: i32) -> (i32, i32, i32) {
    %c0_i32 = arith.constant 0 : i32
    %c0_i32_0 = arith.constant 0 : i32
    %c0_i32_1 = arith.constant 0 : i32
    return %arg1, %c0_i32, %c0_i32_0 : i32, i32, i32
  }
  func.func @transform_7(%arg0: i32, %arg1: i32) -> (i32, i32, i32) {
    %c0_i32 = arith.constant 0 : i32
    %c0_i32_0 = arith.constant 0 : i32
    %c0_i32_1 = arith.constant 0 : i32
    return %arg1, %c0_i32, %c0_i32_0 : i32, i32, i32
  }
  func.func @transform_8(%arg0: i32, %arg1: i32) -> (i32, i32, i32) {
    %c0_i32 = arith.constant 0 : i32
    %c0_i32_0 = arith.constant 0 : i32
    %c0_i32_1 = arith.constant 0 : i32
    return %arg1, %c0_i32, %c0_i32_0 : i32, i32, i32
  }
  func.func @transform_9(%arg0: i32, %arg1: i32) -> (i32, i32, i32) {
    %c0_i32 = arith.constant 0 : i32
    %c0_i32_0 = arith.constant 0 : i32
    %c0_i32_1 = arith.constant 0 : i32
    return %arg1, %c0_i32, %c0_i32_0 : i32, i32, i32
  }
  func.func @transform_10(%arg0: i32, %arg1: i32) -> (i32, i32, i32) {
    %c0_i32 = arith.constant 0 : i32
    %c0_i32_0 = arith.constant 0 : i32
    %c0_i32_1 = arith.constant 0 : i32
    return %arg1, %c0_i32, %c0_i32_0 : i32, i32, i32
  }
  func.func @transform_11(%arg0: i32, %arg1: i32) -> (i32, i32, i32) {
    %c0_i32 = arith.constant 0 : i32
    %c0_i32_0 = arith.constant 0 : i32
    %c0_i32_1 = arith.constant 0 : i32
    return %arg1, %c0_i32, %c0_i32_0 : i32, i32, i32
  }
  func.func @transform_12(%arg0: i32, %arg1: i32) -> (i32, i32, i32) {
    %c0_i32 = arith.constant 0 : i32
    %c0_i32_0 = arith.constant 0 : i32
    %c0_i32_1 = arith.constant 0 : i32
    return %arg1, %c0_i32, %c0_i32_0 : i32, i32, i32
  }
  func.func @transform_13(%arg0: i32, %arg1: i32) -> (i32, i32, i32) {
    %c0_i32 = arith.constant 0 : i32
    %c0_i32_0 = arith.constant 0 : i32
    %c0_i32_1 = arith.constant 0 : i32
    return %arg1, %c0_i32, %c0_i32_0 : i32, i32, i32
  }
  func.func @transform_14(%arg0: i32, %arg1: i32) -> (i32, i32, i32) {
    %c0_i32 = arith.constant 0 : i32
    %c0_i32_0 = arith.constant 0 : i32
    %c0_i32_1 = arith.constant 0 : i32
    return %arg0, %c0_i32, %c0_i32_0 : i32, i32, i32
  }
}

</mosaic_0001>

<llo_original>
// kernel: tpu_custom_call.1
$region0: #{tpu_custom_call.1}
  #allocation0 [shape = 'u32[]', space=smem, size = 0x4, offset = 0x4, fixed_abs, tag = 'smem constant byte address 0x4 - core index']
  #allocation1 [shape = 'u32[72,128]{1,0:T(1,128)}', space=vmem, size = 0x9000, scoped, tag = 'internal scratch']
  #allocation2 [shape = 'f32[16,32]{1,0:T(8,128)}', space=vmem, size = 0x2000, scoped, tag = 'scratch operand']
  #allocation3 [shape = 'bf16[2,8,32]{2,1,0:T(8,128)(2,1)}', space=vmem, size = 0x1000, scoped, tag = 'scratch operand']
  %s0 = inlined_call_operand.vmem [shape: f32[8,8], index: 0, kind: input, shape index: {}]
  %s1 = inlined_call_operand.vmem [shape: f32[2,8,32], index: 1, kind: input, shape index: {}]
  %s2 = inlined_call_operand.vmem [shape: f32[2,1,32], index: 2, kind: input, shape index: {}]
  %s3 = inlined_call_operand.vmem [shape: f32[2,1,32], index: 3, kind: input, shape index: {}]
  %s4 = inlined_call_operand.vmem [shape: bf16[2,32,96], index: 4, kind: input, shape index: {}]
  %s5 = inlined_call_operand.vmem [shape: f32[2,1,96], index: 5, kind: input, shape index: {}]
  %s6 = inlined_call_operand.vmem [shape: bf16[2,32,32], index: 6, kind: input, shape index: {}]
  %s7 = inlined_call_operand.vmem [shape: f32[2,1,32], index: 7, kind: input, shape index: {}]
  %s8 = inlined_call_operand.vmem [shape: f32[2,1,32], index: 8, kind: input, shape index: {}]
  %s9 = inlined_call_operand.vmem [shape: f32[2,1,32], index: 9, kind: input, shape index: {}]
  %s10 = inlined_call_operand.vmem [shape: bf16[2,32,128], index: 10, kind: input, shape index: {}]
  %s11 = inlined_call_operand.vmem [shape: f32[2,1,128], index: 11, kind: input, shape index: {}]
  %s12 = inlined_call_operand.vmem [shape: bf16[2,128,32], index: 12, kind: input, shape index: {}]
  %s13 = inlined_call_operand.vmem [shape: f32[2,1,32], index: 13, kind: input, shape index: {}]
  %s14 = inlined_call_operand.hbm [shape: f32[2,8,32], index: 14, kind: output, shape index: {}]
  %s15 = sld [smem:[#allocation0]]
  $region97: #{tpu_custom_call.1} parent=0
    _
  %s17 = ssub.s32 1, %s15
  %s18 = scalar_select 0, %s17, %s15
  $region1: #{tpu_custom_call.1} parent=0
    #allocation4 [shape = 'u8[8192]{0}', space=vmem, size = 0x2000, scoped, tag = 'output window, operand 0, single buffered']
    #allocation5 [shape = 's32[2]{0}', space=sflag, size = 0x8, scoped, tag = 'scoped memory for tpu_custom_call.1']
    %19 = vsyncpa [#allocation5], 0
    loop: start=0, step=1, limit=4
    $region2: #{tpu_custom_call.1} parent=1 // loop_pre_header
      _
    $region3: #{tpu_custom_call.1} parent=1 // loop_header
      %s21 = sphi 0, %s25
      %p22 = scmp.ge.s32.totalorder %s21, 4
      %s28 = sphi 0, %s40
      %s29 = sphi 0, %s36
      %s30 = sphi 0, %s28
      %s31 = sphi 0, %s29
      %s32 = sphi 0, %s30
      %s33 = sphi 0, %s31
      %s41 = sphi 0, %s41
      %s43 = sphi 0, %s41
      %s44 = sphi 0, %s43
      %s58 = sphi 0, %s44
      %s64 = sphi 0, %s66
      %s67 = sphi 0, %s64
      %s68 = sphi 0, %s67
      %s84 = sphi 0, %s68
      %s90 = sphi 0, %s92
      %s93 = sphi 0, %s90
      %s94 = sphi 0, %s93
      %s110 = sphi 0, %s94
      %s116 = sphi 0, %s118
      %s119 = sphi 0, %s116
      %s120 = sphi 0, %s119
      %s136 = sphi 0, %s120
      %s142 = sphi 0, %s144
      %s145 = sphi 0, %s142
      %s146 = sphi 0, %s145
      %s162 = sphi 0, %s146
      %s168 = sphi 0, %s170
      %s171 = sphi 0, %s168
      %s172 = sphi 0, %s171
      %s188 = sphi 0, %s172
      %s194 = sphi 0, %s196
      %s197 = sphi 0, %s194
      %s198 = sphi 0, %s197
      %s214 = sphi 0, %s198
      %s220 = sphi 0, %s222
      %s223 = sphi 0, %s220
      %s224 = sphi 0, %s223
      %s240 = sphi 0, %s224
      %s246 = sphi 0, %s248
      %s249 = sphi 0, %s246
      %s250 = sphi 0, %s249
      %s266 = sphi 0, %s250
      %s272 = sphi 0, %s274
      %s275 = sphi 0, %s272
      %s276 = sphi 0, %s275
      %s292 = sphi 0, %s276
      %s298 = sphi 0, %s300
      %s301 = sphi 0, %s298
      %s302 = sphi 0, %s301
      %s318 = sphi 0, %s302
      %s324 = sphi 0, %s326
      %s327 = sphi 0, %s324
      %s328 = sphi 0, %s327
      %s344 = sphi 0, %s328
      %s350 = sphi 0, %s352
      %s353 = sphi 0, %s350
      %s354 = sphi 0, %s353
      %s370 = sphi 0, %s354
      %s376 = sphi 0, %s378
      %s379 = sphi 0, %s376
      %s380 = sphi 0, %s379
      %s396 = sphi 0, %s380
      %s402 = sphi 0, %s404
      %s405 = sphi 0, %s402
      %s406 = sphi 0, %s405
      %s422 = sphi 0, %s406
    $region4: #{tpu_custom_call.1} parent=1 // loop_header_branch
      %24 = sbr.rel (%p22) target = $region8
    $region5: #{tpu_custom_call.1} parent=1 // loop_body
      %s26 = ssub.s32 %s21, 1
      %s27 = ssub.s32 %s21, 2
      %s34 = sadd.s32 1, %s29
      %p35 = scmp.ge.s32.totalorder %s34, 2
      %s36 = scalar_select %p35, 0, %s34
      %s37 = sadd.s32 1, %s28
      %s38 = scalar_select %p35, %s37, %s28
      %p39 = scmp.ge.s32.totalorder %s38, 1
      %s40 = scalar_select %p39, 0, %s38
      %s42 = sadd.s32 %s41, 1
      %p45 = scmp.eq.s32.totalorder %s21, 1
      %p46 = scmp.ne.s32.totalorder %s41, %s43
      %p47 = scmp.eq.s32.totalorder %s21, 0
      %p48 = por %p46, %p47
      %p49 = scmp.ne.s32.totalorder %s41, %s43
      %p50 = scmp.eq.s32.totalorder %s26, 1
      %p51 = por %p49, %p50
      %p52 = scmp.ne.s32.totalorder %s43, %s44
      %p53 = scmp.eq.s32.totalorder %s26, 0
      %p54 = por %p52, %p53
      %p55 = scmp.ne.s32.totalorder %s43, %s44
      %p56 = scmp.eq.s32.totalorder %s27, 1
      %p57 = por %p55, %p56
      %p59 = scmp.ne.s32.totalorder %s44, %s58
      %p60 = scmp.eq.s32.totalorder %s27, 0
      %p61 = por %p59, %p60
      %s62 = ssub.s32 %s28, %s40
      %p63 = scmp.eq.s32.totalorder %s62, 0
      %s65 = sadd.s32 %s64, 1
      %s66 = scalar_select %p63, %s64, %s65
      %p69 = pneg %p63
      %p70 = scmp.eq.s32.totalorder %s21, 1
      %p71 = por %p69, %p70
      %p72 = scmp.ne.s32.totalorder %s64, %s67
      %p73 = scmp.eq.s32.totalorder %s21, 0
      %p74 = por %p72, %p73
      %p75 = scmp.ne.s32.totalorder %s64, %s67
      %p76 = scmp.eq.s32.totalorder %s26, 1
      %p77 = por %p75, %p76
      %p78 = scmp.ne.s32.totalorder %s67, %s68
      %p79 = scmp.eq.s32.totalorder %s26, 0
      %p80 = por %p78, %p79
      %p81 = scmp.ne.s32.totalorder %s67, %s68
      %p82 = scmp.eq.s32.totalorder %s27, 1
      %p83 = por %p81, %p82
      %p85 = scmp.ne.s32.totalorder %s68, %s84
      %p86 = scmp.eq.s32.totalorder %s27, 0
      %p87 = por %p85, %p86
      %s88 = ssub.s32 %s29, %s36
      %p89 = scmp.eq.s32.totalorder %s88, 0
      %s91 = sadd.s32 %s90, 1
      %s92 = scalar_select %p89, %s90, %s91
      %p95 = pneg %p89
      %p96 = scmp.eq.s32.totalorder %s21, 1
      %p97 = por %p95, %p96
      %p98 = scmp.ne.s32.totalorder %s90, %s93
      %p99 = scmp.eq.s32.totalorder %s21, 0
      %p100 = por %p98, %p99
      %p101 = scmp.ne.s32.totalorder %s90, %s93
      %p102 = scmp.eq.s32.totalorder %s26, 1
      %p103 = por %p101, %p102
      %p104 = scmp.ne.s32.totalorder %s93, %s94
      %p105 = scmp.eq.s32.totalorder %s26, 0
      %p106 = por %p104, %p105
      %p107 = scmp.ne.s32.totalorder %s93, %s94
      %p108 = scmp.eq.s32.totalorder %s27, 1
      %p109 = por %p107, %p108
      %p111 = scmp.ne.s32.totalorder %s94, %s110
      %p112 = scmp.eq.s32.totalorder %s27, 0
      %p113 = por %p111, %p112
      %s114 = ssub.s32 %s29, %s36
      %p115 = scmp.eq.s32.totalorder %s114, 0
      %s117 = sadd.s32 %s116, 1
      %s118 = scalar_select %p115, %s116, %s117
      %p121 = pneg %p115
      %p122 = scmp.eq.s32.totalorder %s21, 1
      %p123 = por %p121, %p122
      %p124 = scmp.ne.s32.totalorder %s116, %s119
      %p125 = scmp.eq.s32.totalorder %s21, 0
      %p126 = por %p124, %p125
      %p127 = scmp.ne.s32.totalorder %s116, %s119
      %p128 = scmp.eq.s32.totalorder %s26, 1
      %p129 = por %p127, %p128
      %p130 = scmp.ne.s32.totalorder %s119, %s120
      %p131 = scmp.eq.s32.totalorder %s26, 0
      %p132 = por %p130, %p131
      %p133 = scmp.ne.s32.totalorder %s119, %s120
      %p134 = scmp.eq.s32.totalorder %s27, 1
      %p135 = por %p133, %p134
      %p137 = scmp.ne.s32.totalorder %s120, %s136
      %p138 = scmp.eq.s32.totalorder %s27, 0
      %p139 = por %p137, %p138
      %s140 = ssub.s32 %s29, %s36
      %p141 = scmp.eq.s32.totalorder %s140, 0
      %s143 = sadd.s32 %s142, 1
      %s144 = scalar_select %p141, %s142, %s143
      %p147 = pneg %p141
      %p148 = scmp.eq.s32.totalorder %s21, 1
      %p149 = por %p147, %p148
      %p150 = scmp.ne.s32.totalorder %s142, %s145
      %p151 = scmp.eq.s32.totalorder %s21, 0
      %p152 = por %p150, %p151
      %p153 = scmp.ne.s32.totalorder %s142, %s145
      %p154 = scmp.eq.s32.totalorder %s26, 1
      %p155 = por %p153, %p154
      %p156 = scmp.ne.s32.totalorder %s145, %s146
      %p157 = scmp.eq.s32.totalorder %s26, 0
      %p158 = por %p156, %p157
      %p159 = scmp.ne.s32.totalorder %s145, %s146
      %p160 = scmp.eq.s32.totalorder %s27, 1
      %p161 = por %p159, %p160
      %p163 = scmp.ne.s32.totalorder %s146, %s162
      %p164 = scmp.eq.s32.totalorder %s27, 0
      %p165 = por %p163, %p164
      %s166 = ssub.s32 %s29, %s36
      %p167 = scmp.eq.s32.totalorder %s166, 0
      %s169 = sadd.s32 %s168, 1
      %s170 = scalar_select %p167, %s168, %s169
      %p173 = pneg %p167
      %p174 = scmp.eq.s32.totalorder %s21, 1
      %p175 = por %p173, %p174
      %p176 = scmp.ne.s32.totalorder %s168, %s171
      %p177 = scmp.eq.s32.totalorder %s21, 0
      %p178 = por %p176, %p177
      %p179 = scmp.ne.s32.totalorder %s168, %s171
      %p180 = scmp.eq.s32.totalorder %s26, 1
      %p181 = por %p179, %p180
      %p182 = scmp.ne.s32.totalorder %s171, %s172
      %p183 = scmp.eq.s32.totalorder %s26, 0
      %p184 = por %p182, %p183
      %p185 = scmp.ne.s32.totalorder %s171, %s172
      %p186 = scmp.eq.s32.totalorder %s27, 1
      %p187 = por %p185, %p186
      %p189 = scmp.ne.s32.totalorder %s172, %s188
      %p190 = scmp.eq.s32.totalorder %s27, 0
      %p191 = por %p189, %p190
      %s192 = ssub.s32 %s29, %s36
      %p193 = scmp.eq.s32.totalorder %s192, 0
      %s195 = sadd.s32 %s194, 1
      %s196 = scalar_select %p193, %s194, %s195
      %p199 = pneg %p193
      %p200 = scmp.eq.s32.totalorder %s21, 1
      %p201 = por %p199, %p200
      %p202 = scmp.ne.s32.totalorder %s194, %s197
      %p203 = scmp.eq.s32.totalorder %s21, 0
      %p204 = por %p202, %p203
      %p205 = scmp.ne.s32.totalorder %s194, %s197
      %p206 = scmp.eq.s32.totalorder %s26, 1
      %p207 = por %p205, %p206
      %p208 = scmp.ne.s32.totalorder %s197, %s198
      %p209 = scmp.eq.s32.totalorder %s26, 0
      %p210 = por %p208, %p209
      %p211 = scmp.ne.s32.totalorder %s197, %s198
      %p212 = scmp.eq.s32.totalorder %s27, 1
      %p213 = por %p211, %p212
      %p215 = scmp.ne.s32.totalorder %s198, %s214
      %p216 = scmp.eq.s32.totalorder %s27, 0
      %p217 = por %p215, %p216
      %s218 = ssub.s32 %s29, %s36
      %p219 = scmp.eq.s32.totalorder %s218, 0
      %s221 = sadd.s32 %s220, 1
      %s222 = scalar_select %p219, %s220, %s221
      %p225 = pneg %p219
      %p226 = scmp.eq.s32.totalorder %s21, 1
      %p227 = por %p225, %p226
      %p228 = scmp.ne.s32.totalorder %s220, %s223
      %p229 = scmp.eq.s32.totalorder %s21, 0
      %p230 = por %p228, %p229
      %p231 = scmp.ne.s32.totalorder %s220, %s223
      %p232 = scmp.eq.s32.totalorder %s26, 1
      %p233 = por %p231, %p232
      %p234 = scmp.ne.s32.totalorder %s223, %s224
      %p235 = scmp.eq.s32.totalorder %s26, 0
      %p236 = por %p234, %p235
      %p237 = scmp.ne.s32.totalorder %s223, %s224
      %p238 = scmp.eq.s32.totalorder %s27, 1
      %p239 = por %p237, %p238
      %p241 = scmp.ne.s32.totalorder %s224, %s240
      %p242 = scmp.eq.s32.totalorder %s27, 0
      %p243 = por %p241, %p242
      %s244 = ssub.s32 %s29, %s36
      %p245 = scmp.eq.s32.totalorder %s244, 0
      %s247 = sadd.s32 %s246, 1
      %s248 = scalar_select %p245, %s246, %s247
      %p251 = pneg %p245
      %p252 = scmp.eq.s32.totalorder %s21, 1
      %p253 = por %p251, %p252
      %p254 = scmp.ne.s32.totalorder %s246, %s249
      %p255 = scmp.eq.s32.totalorder %s21, 0
      %p256 = por %p254, %p255
      %p257 = scmp.ne.s32.totalorder %s246, %s249
      %p258 = scmp.eq.s32.totalorder %s26, 1
      %p259 = por %p257, %p258
      %p260 = scmp.ne.s32.totalorder %s249, %s250
      %p261 = scmp.eq.s32.totalorder %s26, 0
      %p262 = por %p260, %p261
      %p263 = scmp.ne.s32.totalorder %s249, %s250
      %p264 = scmp.eq.s32.totalorder %s27, 1
      %p265 = por %p263, %p264
      %p267 = scmp.ne.s32.totalorder %s250, %s266
      %p268 = scmp.eq.s32.totalorder %s27, 0
      %p269 = por %p267, %p268
      %s270 = ssub.s32 %s29, %s36
      %p271 = scmp.eq.s32.totalorder %s270, 0
      %s273 = sadd.s32 %s272, 1
      %s274 = scalar_select %p271, %s272, %s273
      %p277 = pneg %p271
      %p278 = scmp.eq.s32.totalorder %s21, 1
      %p279 = por %p277, %p278
      %p280 = scmp.ne.s32.totalorder %s272, %s275
      %p281 = scmp.eq.s32.totalorder %s21, 0
      %p282 = por %p280, %p281
      %p283 = scmp.ne.s32.totalorder %s272, %s275
      %p284 = scmp.eq.s32.totalorder %s26, 1
      %p285 = por %p283, %p284
      %p286 = scmp.ne.s32.totalorder %s275, %s276
      %p287 = scmp.eq.s32.totalorder %s26, 0
      %p288 = por %p286, %p287
      %p289 = scmp.ne.s32.totalorder %s275, %s276
      %p290 = scmp.eq.s32.totalorder %s27, 1
      %p291 = por %p289, %p290
      %p293 = scmp.ne.s32.totalorder %s276, %s292
      %p294 = scmp.eq.s32.totalorder %s27, 0
      %p295 = por %p293, %p294
      %s296 = ssub.s32 %s29, %s36
      %p297 = scmp.eq.s32.totalorder %s296, 0
      %s299 = sadd.s32 %s298, 1
      %s300 = scalar_select %p297, %s298, %s299
      %p303 = pneg %p297
      %p304 = scmp.eq.s32.totalorder %s21, 1
      %p305 = por %p303, %p304
      %p306 = scmp.ne.s32.totalorder %s298, %s301
      %p307 = scmp.eq.s32.totalorder %s21, 0
      %p308 = por %p306, %p307
      %p309 = scmp.ne.s32.totalorder %s298, %s301
      %p310 = scmp.eq.s32.totalorder %s26, 1
      %p311 = por %p309, %p310
      %p312 = scmp.ne.s32.totalorder %s301, %s302
      %p313 = scmp.eq.s32.totalorder %s26, 0
      %p314 = por %p312, %p313
      %p315 = scmp.ne.s32.totalorder %s301, %s302
      %p316 = scmp.eq.s32.totalorder %s27, 1
      %p317 = por %p315, %p316
      %p319 = scmp.ne.s32.totalorder %s302, %s318
      %p320 = scmp.eq.s32.totalorder %s27, 0
      %p321 = por %p319, %p320
      %s322 = ssub.s32 %s29, %s36
      %p323 = scmp.eq.s32.totalorder %s322, 0
      %s325 = sadd.s32 %s324, 1
      %s326 = scalar_select %p323, %s324, %s325
      %p329 = pneg %p323
      %p330 = scmp.eq.s32.totalorder %s21, 1
      %p331 = por %p329, %p330
      %p332 = scmp.ne.s32.totalorder %s324, %s327
      %p333 = scmp.eq.s32.totalorder %s21, 0
      %p334 = por %p332, %p333
      %p335 = scmp.ne.s32.totalorder %s324, %s327
      %p336 = scmp.eq.s32.totalorder %s26, 1
      %p337 = por %p335, %p336
      %p338 = scmp.ne.s32.totalorder %s327, %s328
      %p339 = scmp.eq.s32.totalorder %s26, 0
      %p340 = por %p338, %p339
      %p341 = scmp.ne.s32.totalorder %s327, %s328
      %p342 = scmp.eq.s32.totalorder %s27, 1
      %p343 = por %p341, %p342
      %p345 = scmp.ne.s32.totalorder %s328, %s344
      %p346 = scmp.eq.s32.totalorder %s27, 0
      %p347 = por %p345, %p346
      %s348 = ssub.s32 %s29, %s36
      %p349 = scmp.eq.s32.totalorder %s348, 0
      %s351 = sadd.s32 %s350, 1
      %s352 = scalar_select %p349, %s350, %s351
      %p355 = pneg %p349
      %p356 = scmp.eq.s32.totalorder %s21, 1
      %p357 = por %p355, %p356
      %p358 = scmp.ne.s32.totalorder %s350, %s353
      %p359 = scmp.eq.s32.totalorder %s21, 0
      %p360 = por %p358, %p359
      %p361 = scmp.ne.s32.totalorder %s350, %s353
      %p362 = scmp.eq.s32.totalorder %s26, 1
      %p363 = por %p361, %p362
      %p364 = scmp.ne.s32.totalorder %s353, %s354
      %p365 = scmp.eq.s32.totalorder %s26, 0
      %p366 = por %p364, %p365
      %p367 = scmp.ne.s32.totalorder %s353, %s354
      %p368 = scmp.eq.s32.totalorder %s27, 1
      %p369 = por %p367, %p368
      %p371 = scmp.ne.s32.totalorder %s354, %s370
      %p372 = scmp.eq.s32.totalorder %s27, 0
      %p373 = por %p371, %p372
      %s374 = ssub.s32 %s29, %s36
      %p375 = scmp.eq.s32.totalorder %s374, 0
      %s377 = sadd.s32 %s376, 1
      %s378 = scalar_select %p375, %s376, %s377
      %p381 = pneg %p375
      %p382 = scmp.eq.s32.totalorder %s21, 1
      %p383 = por %p381, %p382
      %p384 = scmp.ne.s32.totalorder %s376, %s379
      %p385 = scmp.eq.s32.totalorder %s21, 0
      %p386 = por %p384, %p385
      %p387 = scmp.ne.s32.totalorder %s376, %s379
      %p388 = scmp.eq.s32.totalorder %s26, 1
      %p389 = por %p387, %p388
      %p390 = scmp.ne.s32.totalorder %s379, %s380
      %p391 = scmp.eq.s32.totalorder %s26, 0
      %p392 = por %p390, %p391
      %p393 = scmp.ne.s32.totalorder %s379, %s380
      %p394 = scmp.eq.s32.totalorder %s27, 1
      %p395 = por %p393, %p394
      %p397 = scmp.ne.s32.totalorder %s380, %s396
      %p398 = scmp.eq.s32.totalorder %s27, 0
      %p399 = por %p397, %p398
      %s400 = ssub.s32 %s28, %s40
      %p401 = scmp.eq.s32.totalorder %s400, 0
      %s403 = sadd.s32 %s402, 1
      %s404 = scalar_select %p401, %s402, %s403
      %p407 = pneg %p401
      %p408 = scmp.eq.s32.totalorder %s21, 1
      %p409 = por %p407, %p408
      %p410 = scmp.ne.s32.totalorder %s402, %s405
      %p411 = scmp.eq.s32.totalorder %s21, 0
      %p412 = por %p410, %p411
      %p413 = scmp.ne.s32.totalorder %s402, %s405
      %p414 = scmp.eq.s32.totalorder %s26, 1
      %p415 = por %p413, %p414
      %p416 = scmp.ne.s32.totalorder %s405, %s406
      %p417 = scmp.eq.s32.totalorder %s26, 0
      %p418 = por %p416, %p417
      %p419 = scmp.ne.s32.totalorder %s405, %s406
      %p420 = scmp.eq.s32.totalorder %s27, 1
      %p421 = por %p419, %p420
      %p423 = scmp.ne.s32.totalorder %s406, %s422
      %p424 = scmp.eq.s32.totalorder %s27, 0
      %p425 = por %p423, %p424
      %p426 = scmp.le.s32.totalorder 1, %s21
      %p427 = scmp.lt.s32.totalorder %s21, 3
      %p428 = pnand %p426, %p427
      %p429 = pneg %p428
      // Predicated region
      $region9: #{tpu_custom_call.1} parent=5 // pred_check
        _
      $region10: #{tpu_custom_call.1} parent=5 // pred_check_branch
        %431 = sbr.rel (%p428) target = $region12
      $region11: #{tpu_custom_call.1} parent=5 // pred_region
        %s432 = ssub.s32 %s21, 1
        // Predicated region
        $region13: #{tpu_custom_call.1} parent=11 // pred_check
          %p433 = pneg %p54
        $region14: #{tpu_custom_call.1} parent=11 // pred_check_branch
          %435 = sbr.rel (%p433) target = $region16
        $region15: #{tpu_custom_call.1} parent=11 // pred_region
          _
        $region16: #{tpu_custom_call.1} parent=11 // pred_fallthru
          _
        // Predicated region
        $region17: #{tpu_custom_call.1} parent=11 // pred_check
          %p436 = pneg %p80
        $region18: #{tpu_custom_call.1} parent=11 // pred_check_branch
          %438 = sbr.rel (%p436) target = $region20
        $region19: #{tpu_custom_call.1} parent=11 // pred_region
          %s439 = smul.u32 2, %s30
          %p440 = scmp.lt.s32.totalorder %s439, 1
          %s441 = scalar_select %p440, %s439, 1
          %s442 = smul.addr %s441, 8
          %s443 = scalar_lea.vmem %s1, %s442
          %s444 = smul.u32 2, %s30
        $region20: #{tpu_custom_call.1} parent=11 // pred_fallthru
          _
      $region12: #{tpu_custom_call.1} parent=5 // pred_fallthru
        _
      %p445 = scmp.lt.s32.totalorder %s21, 2
      // Predicated region
      $region21: #{tpu_custom_call.1} parent=5 // pred_check
        %p446 = pneg %p445
      $region22: #{tpu_custom_call.1} parent=5 // pred_check_branch
        %448 = sbr.rel (%p446) target = $region24
      $region23: #{tpu_custom_call.1} parent=5 // pred_region
        // Predicated region
        $region25: #{tpu_custom_call.1} parent=23 // pred_check
          %p449 = pneg %p100
        $region26: #{tpu_custom_call.1} parent=23 // pred_check_branch
          %451 = sbr.rel (%p449) target = $region28
        $region27: #{tpu_custom_call.1} parent=23 // pred_region
          %p452 = scmp.lt.s32.totalorder %s29, 1
          %s453 = scalar_select %p452, %s29, 1
          %s454 = scalar_lea.vmem %s2, %s453
        $region28: #{tpu_custom_call.1} parent=23 // pred_fallthru
          _
        // Predicated region
        $region29: #{tpu_custom_call.1} parent=23 // pred_check
          %p455 = pneg %p126
        $region30: #{tpu_custom_call.1} parent=23 // pred_check_branch
          %457 = sbr.rel (%p455) target = $region32
        $region31: #{tpu_custom_call.1} parent=23 // pred_region
          %p458 = scmp.lt.s32.totalorder %s29, 1
          %s459 = scalar_select %p458, %s29, 1
          %s460 = scalar_lea.vmem %s3, %s459
        $region32: #{tpu_custom_call.1} parent=23 // pred_fallthru
          _
        // Predicated region
        $region33: #{tpu_custom_call.1} parent=23 // pred_check
          %p461 = pneg %p152
        $region34: #{tpu_custom_call.1} parent=23 // pred_check_branch
          %463 = sbr.rel (%p461) target = $region36
        $region35: #{tpu_custom_call.1} parent=23 // pred_region
          %p464 = scmp.lt.s32.totalorder %s29, 1
          %s465 = scalar_select %p464, %s29, 1
          %s466 = smul.addr %s465, 4
          %s467 = smul.addr %s466, 4
          %s468 = scalar_lea.vmem %s4, %s467
        $region36: #{tpu_custom_call.1} parent=23 // pred_fallthru
          _
        // Predicated region
        $region37: #{tpu_custom_call.1} parent=23 // pred_check
          %p469 = pneg %p178
        $region38: #{tpu_custom_call.1} parent=23 // pred_check_branch
          %471 = sbr.rel (%p469) target = $region40
        $region39: #{tpu_custom_call.1} parent=23 // pred_region
          %p472 = scmp.lt.s32.totalorder %s29, 1
          %s473 = scalar_select %p472, %s29, 1
          %s474 = scalar_lea.vmem %s5, %s473
        $region40: #{tpu_custom_call.1} parent=23 // pred_fallthru
          _
        // Predicated region
        $region41: #{tpu_custom_call.1} parent=23 // pred_check
          %p475 = pneg %p204
        $region42: #{tpu_custom_call.1} parent=23 // pred_check_branch
          %477 = sbr.rel (%p475) target = $region44
        $region43: #{tpu_custom_call.1} parent=23 // pred_region
          %p478 = scmp.lt.s32.totalorder %s29, 1
          %s479 = scalar_select %p478, %s29, 1
          %s480 = smul.addr %s479, 4
          %s481 = smul.addr %s480, 4
          %s482 = scalar_lea.vmem %s6, %s481
        $region44: #{tpu_custom_call.1} parent=23 // pred_fallthru
          _
        // Predicated region
        $region45: #{tpu_custom_call.1} parent=23 // pred_check
          %p483 = pneg %p230
        $region46: #{tpu_custom_call.1} parent=23 // pred_check_branch
          %485 = sbr.rel (%p483) target = $region48
        $region47: #{tpu_custom_call.1} parent=23 // pred_region
          %p486 = scmp.lt.s32.totalorder %s29, 1
          %s487 = scalar_select %p486, %s29, 1
          %s488 = scalar_lea.vmem %s7, %s487
        $region48: #{tpu_custom_call.1} parent=23 // pred_fallthru
          _
        // Predicated region
        $region49: #{tpu_custom_call.1} parent=23 // pred_check
          %p489 = pneg %p256
        $region50: #{tpu_custom_call.1} parent=23 // pred_check_branch
          %491 = sbr.rel (%p489) target = $region52
        $region51: #{tpu_custom_call.1} parent=23 // pred_region
          %p492 = scmp.lt.s32.totalorder %s29, 1
          %s493 = scalar_select %p492, %s29, 1
          %s494 = scalar_lea.vmem %s8, %s493
        $region52: #{tpu_custom_call.1} parent=23 // pred_fallthru
          _
        // Predicated region
        $region53: #{tpu_custom_call.1} parent=23 // pred_check
          %p495 = pneg %p282
        $region54: #{tpu_custom_call.1} parent=23 // pred_check_branch
          %497 = sbr.rel (%p495) target = $region56
        $region55: #{tpu_custom_call.1} parent=23 // pred_region
          %p498 = scmp.lt.s32.totalorder %s29, 1
          %s499 = scalar_select %p498, %s29, 1
          %s500 = scalar_lea.vmem %s9, %s499
        $region56: #{tpu_custom_call.1} parent=23 // pred_fallthru
          _
        // Predicated region
        $region57: #{tpu_custom_call.1} parent=23 // pred_check
          %p501 = pneg %p308
        $region58: #{tpu_custom_call.1} parent=23 // pred_check_branch
          %503 = sbr.rel (%p501) target = $region60
        $region59: #{tpu_custom_call.1} parent=23 // pred_region
          %p504 = scmp.lt.s32.totalorder %s29, 1
          %s505 = scalar_select %p504, %s29, 1
          %s506 = smul.addr %s505, 4
          %s507 = smul.addr %s506, 4
          %s508 = scalar_lea.vmem %s10, %s507
        $region60: #{tpu_custom_call.1} parent=23 // pred_fallthru
          _
        // Predicated region
        $region61: #{tpu_custom_call.1} parent=23 // pred_check
          %p509 = pneg %p334
        $region62: #{tpu_custom_call.1} parent=23 // pred_check_branch
          %511 = sbr.rel (%p509) target = $region64
        $region63: #{tpu_custom_call.1} parent=23 // pred_region
          %p512 = scmp.lt.s32.totalorder %s29, 1
          %s513 = scalar_select %p512, %s29, 1
          %s514 = scalar_lea.vmem %s11, %s513
        $region64: #{tpu_custom_call.1} parent=23 // pred_fallthru
          _
        // Predicated region
        $region65: #{tpu_custom_call.1} parent=23 // pred_check
          %p515 = pneg %p360
        $region66: #{tpu_custom_call.1} parent=23 // pred_check_branch
          %517 = sbr.rel (%p515) target = $region68
        $region67: #{tpu_custom_call.1} parent=23 // pred_region
          %p518 = scmp.lt.s32.totalorder %s29, 1
          %s519 = scalar_select %p518, %s29, 1
          %s520 = smul.addr %s519, 16
          %s521 = smul.addr %s520, 4
          %s522 = scalar_lea.vmem %s12, %s521
        $region68: #{tpu_custom_call.1} parent=23 // pred_fallthru
          _
        // Predicated region
        $region69: #{tpu_custom_call.1} parent=23 // pred_check
          %p523 = pneg %p386
        $region70: #{tpu_custom_call.1} parent=23 // pred_check_branch
          %525 = sbr.rel (%p523) target = $region72
        $region71: #{tpu_custom_call.1} parent=23 // pred_region
          %p526 = scmp.lt.s32.totalorder %s29, 1
          %s527 = scalar_select %p526, %s29, 1
          %s528 = scalar_lea.vmem %s13, %s527
        $region72: #{tpu_custom_call.1} parent=23 // pred_fallthru
          _
      $region24: #{tpu_custom_call.1} parent=5 // pred_fallthru
        _
      %p529 = scmp.le.s32.totalorder 1, %s21
      %p530 = scmp.lt.s32.totalorder %s21, 3
      %p531 = pnand %p529, %p530
      %p532 = pneg %p531
      // Predicated region
      $region73: #{tpu_custom_call.1} parent=5 // pred_check
        _
      $region74: #{tpu_custom_call.1} parent=5 // pred_check_branch
        %534 = sbr.rel (%p531) target = $region76
      $region75: #{tpu_custom_call.1} parent=5 // pred_region
        %s535 = ssub.s32 %s21, 1
        %p536 = pneg %p54
        %p537 = pneg %p51
        %s538 = smul.u32 2, %s30
        %p539 = scmp.lt.s32.totalorder %s538, 1
        %s540 = scalar_select %p539, %s538, 1
        %s541 = smul.addr %s540, 8
        %s542 = scalar_lea.vmem %s1, %s541
        %p543 = pneg %p80
        %p544 = pneg %p77
        %p545 = scmp.lt.s32.totalorder %s31, 1
        %s546 = scalar_select %p545, %s31, 1
        %s547 = scalar_lea.vmem %s2, %s546
        %p548 = pneg %p106
        %p549 = pneg %p103
        %p550 = scmp.lt.s32.totalorder %s31, 1
        %s551 = scalar_select %p550, %s31, 1
        %s552 = scalar_lea.vmem %s3, %s551
        %p553 = pneg %p132
        %p554 = pneg %p129
        %p555 = scmp.lt.s32.totalorder %s31, 1
        %s556 = scalar_select %p555, %s31, 1
        %s557 = smul.addr %s556, 4
        %s558 = smul.addr %s557, 4
        %s559 = scalar_lea.vmem %s4, %s558
        %p560 = pneg %p158
        %p561 = pneg %p155
        %p562 = scmp.lt.s32.totalorder %s31, 1
        %s563 = scalar_select %p562, %s31, 1
        %s564 = scalar_lea.vmem %s5, %s563
        %p565 = pneg %p184
        %p566 = pneg %p181
        %p567 = scmp.lt.s32.totalorder %s31, 1
        %s568 = scalar_select %p567, %s31, 1
        %s569 = smul.addr %s568, 4
        %s570 = smul.addr %s569, 4
        %s571 = scalar_lea.vmem %s6, %s570
        %p572 = pneg %p210
        %p573 = pneg %p207
        %p574 = scmp.lt.s32.totalorder %s31, 1
        %s575 = scalar_select %p574, %s31, 1
        %s576 = scalar_lea.vmem %s7, %s575
        %p577 = pneg %p236
        %p578 = pneg %p233
        %p579 = scmp.lt.s32.totalorder %s31, 1
        %s580 = scalar_select %p579, %s31, 1
        %s581 = scalar_lea.vmem %s8, %s580
        %p582 = pneg %p262
        %p583 = pneg %p259
        %p584 = scmp.lt.s32.totalorder %s31, 1
        %s585 = scalar_select %p584, %s31, 1
        %s586 = scalar_lea.vmem %s9, %s585
        %p587 = pneg %p288
        %p588 = pneg %p285
        %p589 = scmp.lt.s32.totalorder %s31, 1
        %s590 = scalar_select %p589, %s31, 1
        %s591 = smul.addr %s590, 4
        %s592 = smul.addr %s591, 4
        %s593 = scalar_lea.vmem %s10, %s592
        %p594 = pneg %p314
        %p595 = pneg %p311
        %p596 = scmp.lt.s32.totalorder %s31, 1
        %s597 = scalar_select %p596, %s31, 1
        %s598 = scalar_lea.vmem %s11, %s597
        %p599 = pneg %p340
        %p600 = pneg %p337
        %p601 = scmp.lt.s32.totalorder %s31, 1
        %s602 = scalar_select %p601, %s31, 1
        %s603 = smul.addr %s602, 16
        %s604 = smul.addr %s603, 4
        %s605 = scalar_lea.vmem %s12, %s604
        %p606 = pneg %p366
        %p607 = pneg %p363
        %p608 = scmp.lt.s32.totalorder %s31, 1
        %s609 = scalar_select %p608, %s31, 1
        %s610 = scalar_lea.vmem %s13, %s609
        %p611 = pneg %p392
        %p612 = pneg %p389
        %p613 = pneg %p418
        %p614 = pneg %p415
        %s615 = smul.u32 2, %s30
        %p616 = scmp.lt.s32.totalorder %s615, 1
        %s617 = scalar_select %p616, %s615, 1
        %s618 = smul.addr %s617, 8
        %s619 = scalar_lea.vmem %s1, %s618
        %s620 = smul.u32 2, %s30
        %p621 = scmp.lt.s32.totalorder %s31, 1
        %s622 = scalar_select %p621, %s31, 1
        %s623 = scalar_lea.vmem %s2, %s622
        %p624 = scmp.lt.s32.totalorder %s31, 1
        %s625 = scalar_select %p624, %s31, 1
        %s626 = scalar_lea.vmem %s3, %s625
        %p627 = scmp.lt.s32.totalorder %s31, 1
        %s628 = scalar_select %p627, %s31, 1
        %s629 = smul.addr %s628, 4
        %s630 = smul.addr %s629, 4
        %s631 = scalar_lea.vmem %s4, %s630
        %p632 = scmp.lt.s32.totalorder %s31, 1
        %s633 = scalar_select %p632, %s31, 1
        %s634 = scalar_lea.vmem %s5, %s633
        %p635 = scmp.lt.s32.totalorder %s31, 1
        %s636 = scalar_select %p635, %s31, 1
        %s637 = smul.addr %s636, 4
        %s638 = smul.addr %s637, 4
        %s639 = scalar_lea.vmem %s6, %s638
        %p640 = scmp.lt.s32.totalorder %s31, 1
        %s641 = scalar_select %p640, %s31, 1
        %s642 = scalar_lea.vmem %s7, %s641
        %p643 = scmp.lt.s32.totalorder %s31, 1
        %s644 = scalar_select %p643, %s31, 1
        %s645 = scalar_lea.vmem %s8, %s644
        %p646 = scmp.lt.s32.totalorder %s31, 1
        %s647 = scalar_select %p646, %s31, 1
        %s648 = scalar_lea.vmem %s9, %s647
        %p649 = scmp.lt.s32.totalorder %s31, 1
        %s650 = scalar_select %p649, %s31, 1
        %s651 = smul.addr %s650, 4
        %s652 = smul.addr %s651, 4
        %s653 = scalar_lea.vmem %s10, %s652
        %p654 = scmp.lt.s32.totalorder %s31, 1
        %s655 = scalar_select %p654, %s31, 1
        %s656 = scalar_lea.vmem %s11, %s655
        %p657 = scmp.lt.s32.totalorder %s31, 1
        %s658 = scalar_select %p657, %s31, 1
        %s659 = smul.addr %s658, 16
        %s660 = smul.addr %s659, 4
        %s661 = scalar_lea.vmem %s12, %s660
        %p662 = scmp.lt.s32.totalorder %s31, 1
        %s663 = scalar_select %p662, %s31, 1
        %s664 = scalar_lea.vmem %s13, %s663
        %s665 = smul.u32 2, %s30
        %p667 = scmp.eq.s32.totalorder %s31, 0
        // Predicated region
        $region77: #{tpu_custom_call.1} parent=75 // pred_check
          %p668 = pneg %p667
        $region78: #{tpu_custom_call.1} parent=75 // pred_check_branch
          %670 = sbr.rel (%p668) target = $region80
        $region79: #{tpu_custom_call.1} parent=75 // pred_region
          %v671 = vld [vmem:[%s619] sm:$0xff]
          %v672 = vld [vmem:[%s619 + $0x8] sm:$0xff]
          %vm673 = vcmask 261120
          %674 = vst.msk [vmem:[#allocation2] sm:$0xff] %vm673, %v671
          %675 = vst.msk [vmem:[#allocation2 + $0x8] sm:$0xff] %vm673, %v672
        $region80: #{tpu_custom_call.1} parent=75 // pred_fallthru
          _
        %v676 = vld [vmem:[#allocation2] sm:$0xff]
        %v677 = vld [vmem:[#allocation2 + $0x8] sm:$0xff]
        %v678 = vld [vmem:[%s0] sm:$0xff]
        %v679 = vld [vmem:[%s623] sm:$0x1]
        %v680 = vld [vmem:[%s626] sm:$0x1]
        %vm681 = vcmask 261120
        %v682 = vsel %vm681, %v676, 0.0
        %683 = vadd.xlane.f32.xlu0 %v682
        %v684 = vpop.xlane.xlu0 %683
        %v685 = vsel %vm681, %v677, 0.0
        %686 = vadd.xlane.f32.xlu0 %v685
        %v687 = vpop.xlane.xlu0 %686
        %v688 = vrcp.pop 32.0
        %v689 = vmul.f32 32.0, %v688
        %v690 = vsub.f32 1.0, %v689
        %v691 = vmul.f32 %v688, %v690
        %v692 = vadd.f32 %v688, %v691
        %vm693 = vweird.f32 %v688
        %v694 = vsel %vm693, %v688, %v692
        %v695 = vmul.f32 %v684, %v694
        %v696 = vmul.f32 %v687, %v694
        %v697 = vsub.f32 %v676, %v695
        %v698 = vsub.f32 %v677, %v696
        %v699 = vmul.f32 %v697, %v697
        %v700 = vmul.f32 %v698, %v698
        %v701 = vsel %vm681, %v699, 0.0
        %702 = vadd.xlane.f32.xlu0 %v701
        %v703 = vpop.xlane.xlu0 %702
        %v704 = vsel %vm681, %v700, 0.0
        %705 = vadd.xlane.f32.xlu0 %v704
        %v706 = vpop.xlane.xlu0 %705
        %v707 = vmul.f32 %v703, %v694
        %v708 = vmul.f32 %v706, %v694
        %v709 = vadd.f32 %v707, 1e-05
        %v710 = vadd.f32 %v708, 1e-05
        %v711 = vrsqrt.pop %v709
        %v712 = vmul.f32 %v711, %v709
        %v713 = vmul.f32 %v712, %v711
        %v714 = vmul.f32 0.5, %v713
        %v715 = vsub.f32 1.5, %v714
        %v716 = vmul.f32 %v711, %v715
        %vm717 = vweird.f32 %v709
        %vm718 = vweird.f32 %v711
        %vm719 = vmor %vm717, %vm718
        %v720 = vsel %vm719, %v711, %v716
        %v721 = vrsqrt.pop %v710
        %v722 = vmul.f32 %v721, %v710
        %v723 = vmul.f32 %v722, %v721
        %v724 = vmul.f32 0.5, %v723
        %v725 = vsub.f32 1.5, %v724
        %v726 = vmul.f32 %v721, %v725
        %vm727 = vweird.f32 %v710
        %vm728 = vweird.f32 %v721
        %vm729 = vmor %vm727, %vm728
        %v730 = vsel %vm729, %v721, %v726
        %v731 = vmul.f32 %v697, %v720
        %v732 = vmul.f32 %v698, %v730
        %v734 = vperm.slane %v679, 0
        %v736 = vmul.f32 %v731, %v734
        %v737 = vmul.f32 %v732, %v734
        %v739 = vperm.slane %v680, 0
        %v741 = vadd.f32 %v736, %v739
        %v742 = vadd.f32 %v737, %v739
        %v743 = vpack.c.bf16 %v742, %v741
        %v744 = vld [vmem:[%s631] sm:$0xf]
        %v745 = vld [vmem:[%s631 + $0x4] sm:$0xf]
        %v746 = vld [vmem:[%s631 + $0x8] sm:$0xf]
        %v747 = vld [vmem:[%s631 + $0xc] sm:$0xf]
        %v748 = vld [vmem:[%s634] sm:$0x1]
        %v750 = vperm.slane %v748, 0
        %v756 = vunpack.c.l.b16 %v744
        %v757 = vunpack.c.l.b16 %v745
        %v758 = vunpack.c.l.b16 %v746
        %v759 = vunpack.c.l.b16 %v747
        %v760 = vpack.c.b16 %v757, %v756
        %v761 = vpack.c.b16 %v759, %v758
        %v765 = vsel %vm681, %v743, 0
        %767 = vmatpush.bf16.msra.mxu0 0
        %768 = vmatpush.bf16.msra.mxu0 0
        %769 = vmatpush.bf16.msra.mxu0 0
        %770 = vmatpush.bf16.msra.mxu0 0
        %771 = vmatpush.bf16.msra.mxu0 0
        %772 = vmatpush.bf16.msra.mxu0 0
        %773 = vmatpush.bf16.msra.mxu0 %v761
        %774 = vmatpush.bf16.msra.mxu0 %v760
        %775 = vmatmul.bf16.gmra.mxu0 %v765
        %v776 = vpop.f32.mrf.mxu0
        %v777 = vadd.f32 %v750, %v776
        %v778 = vpop.f32.mrf.mxu0
        %v779 = vadd.f32 %v750, %v778
        %780 = vdwg.mxu0
        %v781 = vpack.c.bf16 %v777, %v777
        %v782 = vpack.c.bf16 %v779, %v779
        %v783 = vunpack.c.l.bf16 %v781
        %v784 = vmul.f32 %v783, 0.35351563
        %v785 = vpack.c.bf16 %v784, %v784
        %v787 = vunpack.c.l.b16 %v781
        %v788 = vpack.c.b16 %v787, %v787
        %789 = vrot.lane.b32.xlu0 %v788, 96
        %v790 = vpop.permute.xlu0 %789
        %vm791 = vcmask 64512
        %v793 = vsel %vm791, %v785, 0
        %v796 = vsel %vm791, %v790, 0
        %798 = vmatpush.bf16.xpose.msra.mxu0 0
        %799 = vmatpush.bf16.xpose.msra.mxu0 0
        %800 = vmatpush.bf16.xpose.msra.mxu0 0
        %801 = vmatpush.bf16.xpose.msra.mxu0 0
        %802 = vmatpush.bf16.xpose.msra.mxu0 0
        %803 = vmatpush.bf16.xpose.msra.mxu0 0
        %804 = vmatpush.bf16.xpose.msra.mxu0 0
        %805 = vmatpush.bf16.xpose.msra.mxu0 %v796
        %806 = vmatmul.bf16.gmra.mxu0 %v793
        %v807 = vpop.f32.mrf.mxu0
        %v808 = vadd.f32 %v678, %v807
        %v809 = vpop.f32.mrf.mxu0
        %810 = vdwg.mxu0
        %v811 = vsel %vm791, %v808, -inf
        %812 = vmax.xlane.f32.xlu0 %v811
        %v813 = vpop.xlane.xlu0 %812
        %v814 = vsub.f32 %v808, %v813
        %v815 = vmul.f32 %v814, 1.442695
        %v816 = vpow.pop %v815
        %v817 = vsel %vm791, %v816, 0.0
        %818 = vadd.xlane.f32.xlu0 %v817
        %v819 = vpop.xlane.xlu0 %818
        %v820 = vrcp.pop %v819
        %v821 = vmul.f32 %v816, %v820
        %v822 = vpack.c.bf16 %v821, %v821
        %823 = vrot.lane.b32.xlu0 %v788, 64
        %v824 = vpop.permute.xlu0 %823
        %v826 = vsel %vm791, %v822, 0
        %vm828 = vcmask 1043456
        %v830 = vsel %vm828, %v824, 0
        %832 = vmatpush.bf16.msra.mxu0 0
        %833 = vmatpush.bf16.msra.mxu0 0
        %834 = vmatpush.bf16.msra.mxu0 0
        %835 = vmatpush.bf16.msra.mxu0 0
        %836 = vmatpush.bf16.msra.mxu0 0
        %837 = vmatpush.bf16.msra.mxu0 0
        %838 = vmatpush.bf16.msra.mxu0 0
        %839 = vmatpush.bf16.msra.mxu0 %v830
        %840 = vmatmul.bf16.gmra.mxu0 %v826
        %v841 = vpop.f32.mrf.mxu0
        %v842 = vadd.f32 0.0, %v841
        %v843 = vpop.f32.mrf.mxu0
        %844 = vdwg.mxu0
        %v845 = vpack.c.bf16 %v842, %v842
        %847 = vrot.lane.b32.xlu0 %v785, 120
        %v848 = vpop.permute.xlu0 %847
        %849 = vrot.lane.b32.xlu0 %v788, 88
        %v850 = vpop.permute.xlu0 %849
        %v852 = vsel %vm791, %v848, 0
        %v855 = vsel %vm791, %v850, 0
        %857 = vmatpush.bf16.xpose.msra.mxu0 0
        %858 = vmatpush.bf16.xpose.msra.mxu0 0
        %859 = vmatpush.bf16.xpose.msra.mxu0 0
        %860 = vmatpush.bf16.xpose.msra.mxu0 0
        %861 = vmatpush.bf16.xpose.msra.mxu0 0
        %862 = vmatpush.bf16.xpose.msra.mxu0 0
        %863 = vmatpush.bf16.xpose.msra.mxu0 0
        %864 = vmatpush.bf16.xpose.msra.mxu0 %v855
        %865 = vmatmul.bf16.gmra.mxu0 %v852
        %v866 = vpop.f32.mrf.mxu0
        %v867 = vadd.f32 %v678, %v866
        %v868 = vpop.f32.mrf.mxu0
        %869 = vdwg.mxu0
        %v870 = vsel %vm791, %v867, -inf
        %871 = vmax.xlane.f32.xlu0 %v870
        %v872 = vpop.xlane.xlu0 %871
        %v873 = vsub.f32 %v867, %v872
        %v874 = vmul.f32 %v873, 1.442695
        %v875 = vpow.pop %v874
        %v876 = vsel %vm791, %v875, 0.0
        %877 = vadd.xlane.f32.xlu0 %v876
        %v878 = vpop.xlane.xlu0 %877
        %v879 = vrcp.pop %v878
        %v880 = vmul.f32 %v875, %v879
        %v881 = vpack.c.bf16 %v880, %v880
        %882 = vrot.lane.b32.xlu0 %v788, 56
        %v883 = vpop.permute.xlu0 %882
        %v885 = vsel %vm791, %v881, 0
        %v888 = vsel %vm828, %v883, 0
        %890 = vmatpush.bf16.msra.mxu0 0
        %891 = vmatpush.bf16.msra.mxu0 0
        %892 = vmatpush.bf16.msra.mxu0 0
        %893 = vmatpush.bf16.msra.mxu0 0
        %894 = vmatpush.bf16.msra.mxu0 0
        %895 = vmatpush.bf16.msra.mxu0 0
        %896 = vmatpush.bf16.msra.mxu0 0
        %897 = vmatpush.bf16.msra.mxu0 %v888
        %898 = vmatmul.bf16.gmra.mxu0 %v885
        %v899 = vpop.f32.mrf.mxu0
        %v900 = vadd.f32 0.0, %v899
        %v901 = vpop.f32.mrf.mxu0
        %902 = vdwg.mxu0
        %v903 = vpack.c.bf16 %v900, %v900
        %904 = vrot.lane.b32.xlu0 %v785, 112
        %v905 = vpop.permute.xlu0 %904
        %906 = vrot.lane.b32.xlu0 %v788, 80
        %v907 = vpop.permute.xlu0 %906
        %v909 = vsel %vm791, %v905, 0
        %v912 = vsel %vm791, %v907, 0
        %914 = vmatpush.bf16.xpose.msra.mxu0 0
        %915 = vmatpush.bf16.xpose.msra.mxu0 0
        %916 = vmatpush.bf16.xpose.msra.mxu0 0
        %917 = vmatpush.bf16.xpose.msra.mxu0 0
        %918 = vmatpush.bf16.xpose.msra.mxu0 0
        %919 = vmatpush.bf16.xpose.msra.mxu0 0
        %920 = vmatpush.bf16.xpose.msra.mxu0 0
        %921 = vmatpush.bf16.xpose.msra.mxu0 %v912
        %922 = vmatmul.bf16.gmra.mxu0 %v909
        %v923 = vpop.f32.mrf.mxu0
        %v924 = vadd.f32 %v678, %v923
        %v925 = vpop.f32.mrf.mxu0
        %926 = vdwg.mxu0
        %v927 = vsel %vm791, %v924, -inf
        %928 = vmax.xlane.f32.xlu0 %v927
        %v929 = vpop.xlane.xlu0 %928
        %v930 = vsub.f32 %v924, %v929
        %v931 = vmul.f32 %v930, 1.442695
        %v932 = vpow.pop %v931
        %v933 = vsel %vm791, %v932, 0.0
        %934 = vadd.xlane.f32.xlu0 %v933
        %v935 = vpop.xlane.xlu0 %934
        %v936 = vrcp.pop %v935
        %v937 = vmul.f32 %v932, %v936
        %v938 = vpack.c.bf16 %v937, %v937
        %939 = vrot.lane.b32.xlu0 %v788, 48
        %v940 = vpop.permute.xlu0 %939
        %v942 = vsel %vm791, %v938, 0
        %v945 = vsel %vm828, %v940, 0
        %947 = vmatpush.bf16.msra.mxu0 0
        %948 = vmatpush.bf16.msra.mxu0 0
        %949 = vmatpush.bf16.msra.mxu0 0
        %950 = vmatpush.bf16.msra.mxu0 0
        %951 = vmatpush.bf16.msra.mxu0 0
        %952 = vmatpush.bf16.msra.mxu0 0
        %953 = vmatpush.bf16.msra.mxu0 0
        %954 = vmatpush.bf16.msra.mxu0 %v945
        %955 = vmatmul.bf16.gmra.mxu0 %v942
        %v956 = vpop.f32.mrf.mxu0
        %v957 = vadd.f32 0.0, %v956
        %v958 = vpop.f32.mrf.mxu0
        %959 = vdwg.mxu0
        %v960 = vpack.c.bf16 %v957, %v957
        %961 = vrot.lane.b32.xlu0 %v785, 104
        %v962 = vpop.permute.xlu0 %961
        %963 = vrot.lane.b32.xlu0 %v788, 72
        %v964 = vpop.permute.xlu0 %963
        %v966 = vsel %vm791, %v962, 0
        %v969 = vsel %vm791, %v964, 0
        %971 = vmatpush.bf16.xpose.msra.mxu0 0
        %972 = vmatpush.bf16.xpose.msra.mxu0 0
        %973 = vmatpush.bf16.xpose.msra.mxu0 0
        %974 = vmatpush.bf16.xpose.msra.mxu0 0
        %975 = vmatpush.bf16.xpose.msra.mxu0 0
        %976 = vmatpush.bf16.xpose.msra.mxu0 0
        %977 = vmatpush.bf16.xpose.msra.mxu0 0
        %978 = vmatpush.bf16.xpose.msra.mxu0 %v969
        %979 = vmatmul.bf16.gmra.mxu0 %v966
        %v980 = vpop.f32.mrf.mxu0
        %v981 = vadd.f32 %v678, %v980
        %v982 = vpop.f32.mrf.mxu0
        %983 = vdwg.mxu0
        %v984 = vsel %vm791, %v981, -inf
        %985 = vmax.xlane.f32.xlu0 %v984
        %v986 = vpop.xlane.xlu0 %985
        %v987 = vsub.f32 %v981, %v986
        %v988 = vmul.f32 %v987, 1.442695
        %v989 = vpow.pop %v988
        %v990 = vsel %vm791, %v989, 0.0
        %991 = vadd.xlane.f32.xlu0 %v990
        %v992 = vpop.xlane.xlu0 %991
        %v993 = vrcp.pop %v992
        %v994 = vmul.f32 %v989, %v993
        %v995 = vpack.c.bf16 %v994, %v994
        %996 = vrot.lane.b32.xlu0 %v788, 40
        %v997 = vpop.permute.xlu0 %996
        %v999 = vsel %vm791, %v995, 0
        %v1002 = vsel %vm828, %v997, 0
        %1004 = vmatpush.bf16.msra.mxu0 0
        %1005 = vmatpush.bf16.msra.mxu0 0
        %1006 = vmatpush.bf16.msra.mxu0 0
        %1007 = vmatpush.bf16.msra.mxu0 0
        %1008 = vmatpush.bf16.msra.mxu0 0
        %1009 = vmatpush.bf16.msra.mxu0 0
        %1010 = vmatpush.bf16.msra.mxu0 0
        %1011 = vmatpush.bf16.msra.mxu0 %v1002
        %1012 = vmatmul.bf16.gmra.mxu0 %v999
        %v1013 = vpop.f32.mrf.mxu0
        %v1014 = vadd.f32 0.0, %v1013
        %v1015 = vpop.f32.mrf.mxu0
        %1016 = vdwg.mxu0
        %v1017 = vpack.c.bf16 %v1014, %v1014
        %v1019 = vunpack.c.l.b16 %v903
        %v1020 = vpack.c.b16 %v1019, %v1019
        %1021 = vrot.lane.b32.xlu0 %v1020, 8
        %v1022 = vpop.permute.xlu0 %1021
        %v1024 = vunpack.c.l.b16 %v960
        %v1025 = vpack.c.b16 %v1024, %v1024
        %1026 = vrot.lane.b32.xlu0 %v1025, 16
        %v1027 = vpop.permute.xlu0 %1026
        %v1029 = vunpack.c.l.b16 %v1017
        %v1030 = vpack.c.b16 %v1029, %v1029
        %1031 = vrot.lane.b32.xlu0 %v1030, 24
        %v1032 = vpop.permute.xlu0 %1031
        %v1035 = vsel %vm791, %v845, %v1022
        %vm1036 = vcmask 130048
        %v1038 = vsel %vm1036, %v1035, %v1027
        %vm1039 = vcmask 195584
        %v1041 = vsel %vm1039, %v1038, %v1032
        %vm1043 = vcmask 257024
        %1044 = vst.msk [vmem:[#allocation3] sm:$0xf] %vm1043, %v1041
        %v1045 = vunpack.c.l.bf16 %v782
        %v1046 = vmul.f32 %v1045, 0.35351563
        %v1047 = vpack.c.bf16 %v1046, %v1046
        %v1049 = vunpack.c.l.b16 %v782
        %v1050 = vpack.c.b16 %v1049, %v1049
        %1051 = vrot.lane.b32.xlu0 %v1050, 96
        %v1052 = vpop.permute.xlu0 %1051
        %v1054 = vsel %vm791, %v1047, 0
        %v1057 = vsel %vm791, %v1052, 0
        %1059 = vmatpush.bf16.xpose.msra.mxu0 0
        %1060 = vmatpush.bf16.xpose.msra.mxu0 0
        %1061 = vmatpush.bf16.xpose.msra.mxu0 0
        %1062 = vmatpush.bf16.xpose.msra.mxu0 0
        %1063 = vmatpush.bf16.xpose.msra.mxu0 0
        %1064 = vmatpush.bf16.xpose.msra.mxu0 0
        %1065 = vmatpush.bf16.xpose.msra.mxu0 0
        %1066 = vmatpush.bf16.xpose.msra.mxu0 %v1057
        %1067 = vmatmul.bf16.gmra.mxu0 %v1054
        %v1068 = vpop.f32.mrf.mxu0
        %v1069 = vadd.f32 %v678, %v1068
        %v1070 = vpop.f32.mrf.mxu0
        %1071 = vdwg.mxu0
        %v1072 = vsel %vm791, %v1069, -inf
        %1073 = vmax.xlane.f32.xlu0 %v1072
        %v1074 = vpop.xlane.xlu0 %1073
        %v1075 = vsub.f32 %v1069, %v1074
        %v1076 = vmul.f32 %v1075, 1.442695
        %v1077 = vpow.pop %v1076
        %v1078 = vsel %vm791, %v1077, 0.0
        %1079 = vadd.xlane.f32.xlu0 %v1078
        %v1080 = vpop.xlane.xlu0 %1079
        %v1081 = vrcp.pop %v1080
        %v1082 = vmul.f32 %v1077, %v1081
        %v1083 = vpack.c.bf16 %v1082, %v1082
        %1084 = vrot.lane.b32.xlu0 %v1050, 64
        %v1085 = vpop.permute.xlu0 %1084
        %v1087 = vsel %vm791, %v1083, 0
        %v1090 = vsel %vm828, %v1085, 0
        %1092 = vmatpush.bf16.msra.mxu0 0
        %1093 = vmatpush.bf16.msra.mxu0 0
        %1094 = vmatpush.bf16.msra.mxu0 0
        %1095 = vmatpush.bf16.msra.mxu0 0
        %1096 = vmatpush.bf16.msra.mxu0 0
        %1097 = vmatpush.bf16.msra.mxu0 0
        %1098 = vmatpush.bf16.msra.mxu0 0
        %1099 = vmatpush.bf16.msra.mxu0 %v1090
        %1100 = vmatmul.bf16.gmra.mxu0 %v1087
        %v1101 = vpop.f32.mrf.mxu0
        %v1102 = vadd.f32 0.0, %v1101
        %v1103 = vpop.f32.mrf.mxu0
        %1104 = vdwg.mxu0
        %v1105 = vpack.c.bf16 %v1102, %v1102
        %1107 = vrot.lane.b32.xlu0 %v1047, 120
        %v1108 = vpop.permute.xlu0 %1107
        %1109 = vrot.lane.b32.xlu0 %v1050, 88
        %v1110 = vpop.permute.xlu0 %1109
        %v1112 = vsel %vm791, %v1108, 0
        %v1115 = vsel %vm791, %v1110, 0
        %1117 = vmatpush.bf16.xpose.msra.mxu0 0
        %1118 = vmatpush.bf16.xpose.msra.mxu0 0
        %1119 = vmatpush.bf16.xpose.msra.mxu0 0
        %1120 = vmatpush.bf16.xpose.msra.mxu0 0
        %1121 = vmatpush.bf16.xpose.msra.mxu0 0
        %1122 = vmatpush.bf16.xpose.msra.mxu0 0
        %1123 = vmatpush.bf16.xpose.msra.mxu0 0
        %1124 = vmatpush.bf16.xpose.msra.mxu0 %v1115
        %1125 = vmatmul.bf16.gmra.mxu0 %v1112
        %v1126 = vpop.f32.mrf.mxu0
        %v1127 = vadd.f32 %v678, %v1126
        %v1128 = vpop.f32.mrf.mxu0
        %1129 = vdwg.mxu0
        %v1130 = vsel %vm791, %v1127, -inf
        %1131 = vmax.xlane.f32.xlu0 %v1130
        %v1132 = vpop.xlane.xlu0 %1131
        %v1133 = vsub.f32 %v1127, %v1132
        %v1134 = vmul.f32 %v1133, 1.442695
        %v1135 = vpow.pop %v1134
        %v1136 = vsel %vm791, %v1135, 0.0
        %1137 = vadd.xlane.f32.xlu0 %v1136
        %v1138 = vpop.xlane.xlu0 %1137
        %v1139 = vrcp.pop %v1138
        %v1140 = vmul.f32 %v1135, %v1139
        %v1141 = vpack.c.bf16 %v1140, %v1140
        %1142 = vrot.lane.b32.xlu0 %v1050, 56
        %v1143 = vpop.permute.xlu0 %1142
        %v1145 = vsel %vm791, %v1141, 0
        %v1148 = vsel %vm828, %v1143, 0
        %1150 = vmatpush.bf16.msra.mxu0 0
        %1151 = vmatpush.bf16.msra.mxu0 0
        %1152 = vmatpush.bf16.msra.mxu0 0
        %1153 = vmatpush.bf16.msra.mxu0 0
        %1154 = vmatpush.bf16.msra.mxu0 0
        %1155 = vmatpush.bf16.msra.mxu0 0
        %1156 = vmatpush.bf16.msra.mxu0 0
        %1157 = vmatpush.bf16.msra.mxu0 %v1148
        %1158 = vmatmul.bf16.gmra.mxu0 %v1145
        %v1159 = vpop.f32.mrf.mxu0
        %v1160 = vadd.f32 0.0, %v1159
        %v1161 = vpop.f32.mrf.mxu0
        %1162 = vdwg.mxu0
        %v1163 = vpack.c.bf16 %v1160, %v1160
        %1164 = vrot.lane.b32.xlu0 %v1047, 112
        %v1165 = vpop.permute.xlu0 %1164
        %1166 = vrot.lane.b32.xlu0 %v1050, 80
        %v1167 = vpop.permute.xlu0 %1166
        %v1169 = vsel %vm791, %v1165, 0
        %v1172 = vsel %vm791, %v1167, 0
        %1174 = vmatpush.bf16.xpose.msra.mxu0 0
        %1175 = vmatpush.bf16.xpose.msra.mxu0 0
        %1176 = vmatpush.bf16.xpose.msra.mxu0 0
        %1177 = vmatpush.bf16.xpose.msra.mxu0 0
        %1178 = vmatpush.bf16.xpose.msra.mxu0 0
        %1179 = vmatpush.bf16.xpose.msra.mxu0 0
        %1180 = vmatpush.bf16.xpose.msra.mxu0 0
        %1181 = vmatpush.bf16.xpose.msra.mxu0 %v1172
        %1182 = vmatmul.bf16.gmra.mxu0 %v1169
        %v1183 = vpop.f32.mrf.mxu0
        %v1184 = vadd.f32 %v678, %v1183
        %v1185 = vpop.f32.mrf.mxu0
        %1186 = vdwg.mxu0
        %v1187 = vsel %vm791, %v1184, -inf
        %1188 = vmax.xlane.f32.xlu0 %v1187
        %v1189 = vpop.xlane.xlu0 %1188
        %v1190 = vsub.f32 %v1184, %v1189
        %v1191 = vmul.f32 %v1190, 1.442695
        %v1192 = vpow.pop %v1191
        %v1193 = vsel %vm791, %v1192, 0.0
        %1194 = vadd.xlane.f32.xlu0 %v1193
        %v1195 = vpop.xlane.xlu0 %1194
        %v1196 = vrcp.pop %v1195
        %v1197 = vmul.f32 %v1192, %v1196
        %v1198 = vpack.c.bf16 %v1197, %v1197
        %1199 = vrot.lane.b32.xlu0 %v1050, 48
        %v1200 = vpop.permute.xlu0 %1199
        %v1202 = vsel %vm791, %v1198, 0
        %v1205 = vsel %vm828, %v1200, 0
        %1207 = vmatpush.bf16.msra.mxu0 0
        %1208 = vmatpush.bf16.msra.mxu0 0
        %1209 = vmatpush.bf16.msra.mxu0 0
        %1210 = vmatpush.bf16.msra.mxu0 0
        %1211 = vmatpush.bf16.msra.mxu0 0
        %1212 = vmatpush.bf16.msra.mxu0 0
        %1213 = vmatpush.bf16.msra.mxu0 0
        %1214 = vmatpush.bf16.msra.mxu0 %v1205
        %1215 = vmatmul.bf16.gmra.mxu0 %v1202
        %v1216 = vpop.f32.mrf.mxu0
        %v1217 = vadd.f32 0.0, %v1216
        %v1218 = vpop.f32.mrf.mxu0
        %1219 = vdwg.mxu0
        %v1220 = vpack.c.bf16 %v1217, %v1217
        %1221 = vrot.lane.b32.xlu0 %v1047, 104
        %v1222 = vpop.permute.xlu0 %1221
        %1223 = vrot.lane.b32.xlu0 %v1050, 72
        %v1224 = vpop.permute.xlu0 %1223
        %v1226 = vsel %vm791, %v1222, 0
        %v1229 = vsel %vm791, %v1224, 0
        %1231 = vmatpush.bf16.xpose.msra.mxu0 0
        %1232 = vmatpush.bf16.xpose.msra.mxu0 0
        %1233 = vmatpush.bf16.xpose.msra.mxu0 0
        %1234 = vmatpush.bf16.xpose.msra.mxu0 0
        %1235 = vmatpush.bf16.xpose.msra.mxu0 0
        %1236 = vmatpush.bf16.xpose.msra.mxu0 0
        %1237 = vmatpush.bf16.xpose.msra.mxu0 0
        %1238 = vmatpush.bf16.xpose.msra.mxu0 %v1229
        %1239 = vmatmul.bf16.gmra.mxu0 %v1226
        %v1240 = vpop.f32.mrf.mxu0
        %v1241 = vadd.f32 %v678, %v1240
        %v1242 = vpop.f32.mrf.mxu0
        %1243 = vdwg.mxu0
        %v1244 = vsel %vm791, %v1241, -inf
        %1245 = vmax.xlane.f32.xlu0 %v1244
        %v1246 = vpop.xlane.xlu0 %1245
        %v1247 = vsub.f32 %v1241, %v1246
        %v1248 = vmul.f32 %v1247, 1.442695
        %v1249 = vpow.pop %v1248
        %v1250 = vsel %vm791, %v1249, 0.0
        %1251 = vadd.xlane.f32.xlu0 %v1250
        %v1252 = vpop.xlane.xlu0 %1251
        %v1253 = vrcp.pop %v1252
        %v1254 = vmul.f32 %v1249, %v1253
        %v1255 = vpack.c.bf16 %v1254, %v1254
        %1256 = vrot.lane.b32.xlu0 %v1050, 40
        %v1257 = vpop.permute.xlu0 %1256
        %v1259 = vsel %vm791, %v1255, 0
        %v1262 = vsel %vm828, %v1257, 0
        %1264 = vmatpush.bf16.msra.mxu0 0
        %1265 = vmatpush.bf16.msra.mxu0 0
        %1266 = vmatpush.bf16.msra.mxu0 0
        %1267 = vmatpush.bf16.msra.mxu0 0
        %1268 = vmatpush.bf16.msra.mxu0 0
        %1269 = vmatpush.bf16.msra.mxu0 0
        %1270 = vmatpush.bf16.msra.mxu0 0
        %1271 = vmatpush.bf16.msra.mxu0 %v1262
        %1272 = vmatmul.bf16.gmra.mxu0 %v1259
        %v1273 = vpop.f32.mrf.mxu0
        %v1274 = vadd.f32 0.0, %v1273
        %v1275 = vpop.f32.mrf.mxu0
        %1276 = vdwg.mxu0
        %v1277 = vpack.c.bf16 %v1274, %v1274
        %v1279 = vunpack.c.l.b16 %v1163
        %v1280 = vpack.c.b16 %v1279, %v1279
        %1281 = vrot.lane.b32.xlu0 %v1280, 8
        %v1282 = vpop.permute.xlu0 %1281
        %v1284 = vunpack.c.l.b16 %v1220
        %v1285 = vpack.c.b16 %v1284, %v1284
        %1286 = vrot.lane.b32.xlu0 %v1285, 16
        %v1287 = vpop.permute.xlu0 %1286
        %v1289 = vunpack.c.l.b16 %v1277
        %v1290 = vpack.c.b16 %v1289, %v1289
        %1291 = vrot.lane.b32.xlu0 %v1290, 24
        %v1292 = vpop.permute.xlu0 %1291
        %v1295 = vsel %vm791, %v1105, %v1282
        %v1297 = vsel %vm1036, %v1295, %v1287
        %v1299 = vsel %vm1039, %v1297, %v1292
        %s1301 = scalar_lea.vmem [#allocation3], 4
        %1302 = vst.msk [vmem:[%s1301] sm:$0xf] %vm1043, %v1299
        %v1303 = vld [vmem:[#allocation3] sm:$0xf]
        %v1304 = vld [vmem:[#allocation3 + $0x4] sm:$0xf]
        %v1305 = vld [vmem:[%s639] sm:$0xf]
        %v1306 = vld [vmem:[%s639 + $0x4] sm:$0xf]
        %v1307 = vld [vmem:[%s639 + $0x8] sm:$0xf]
        %v1308 = vld [vmem:[%s639 + $0xc] sm:$0xf]
        %v1309 = vld [vmem:[%s642] sm:$0x1]
        %v1311 = vperm.slane %v1309, 0
        %v1315 = vunpack.c.l.b16 %v1303
        %v1316 = vunpack.c.l.b16 %v1304
        %v1317 = vpack.c.b16 %v1316, %v1315
        %v1322 = vunpack.c.l.b16 %v1305
        %v1323 = vunpack.c.l.b16 %v1306
        %v1324 = vunpack.c.l.b16 %v1307
        %v1325 = vunpack.c.l.b16 %v1308
        %v1326 = vpack.c.b16 %v1323, %v1322
        %v1327 = vpack.c.b16 %v1325, %v1324
        %v1331 = vsel %vm681, %v1317, 0
        %1333 = vmatpush.bf16.msra.mxu0 0
        %1334 = vmatpush.bf16.msra.mxu0 0
        %1335 = vmatpush.bf16.msra.mxu0 0
        %1336 = vmatpush.bf16.msra.mxu0 0
        %1337 = vmatpush.bf16.msra.mxu0 0
        %1338 = vmatpush.bf16.msra.mxu0 0
        %1339 = vmatpush.bf16.msra.mxu0 %v1327
        %1340 = vmatpush.bf16.msra.mxu0 %v1326
        %1341 = vmatmul.bf16.gmra.mxu0 %v1331
        %v1342 = vpop.f32.mrf.mxu0
        %v1343 = vadd.f32 %v1311, %v1342
        %v1344 = vpop.f32.mrf.mxu0
        %v1345 = vadd.f32 %v1311, %v1344
        %1346 = vdwg.mxu0
        %v1347 = vadd.f32 %v676, %v1343
        %v1348 = vadd.f32 %v677, %v1345
        %1349 = vst.msk [vmem:[#allocation2] sm:$0xff] %vm681, %v1347
        %1350 = vst.msk [vmem:[#allocation2 + $0x8] sm:$0xff] %vm681, %v1348
        %v1351 = vld [vmem:[%s645] sm:$0x1]
        %v1352 = vld [vmem:[%s648] sm:$0x1]
        %v1353 = vld [vmem:[%s653] sm:$0xf]
        %v1354 = vld [vmem:[%s653 + $0x4] sm:$0xf]
        %v1355 = vld [vmem:[%s653 + $0x8] sm:$0xf]
        %v1356 = vld [vmem:[%s653 + $0xc] sm:$0xf]
        %v1357 = vld [vmem:[%s656] sm:$0x1]
        %v1358 = vld [vmem:[%s661] sm:$0xf]
        %v1359 = vld [vmem:[%s661 + $0x4] sm:$0xf]
        %v1360 = vld [vmem:[%s661 + $0x8] sm:$0xf]
        %v1361 = vld [vmem:[%s661 + $0xc] sm:$0xf]
        %v1362 = vld [vmem:[%s661 + $0x10] sm:$0xf]
        %v1363 = vld [vmem:[%s661 + $0x14] sm:$0xf]
        %v1364 = vld [vmem:[%s661 + $0x18] sm:$0xf]
        %v1365 = vld [vmem:[%s661 + $0x1c] sm:$0xf]
        %v1366 = vld [vmem:[%s661 + $0x20] sm:$0xf]
        %v1367 = vld [vmem:[%s661 + $0x24] sm:$0xf]
        %v1368 = vld [vmem:[%s661 + $0x28] sm:$0xf]
        %v1369 = vld [vmem:[%s661 + $0x2c] sm:$0xf]
        %v1370 = vld [vmem:[%s661 + $0x30] sm:$0xf]
        %v1371 = vld [vmem:[%s661 + $0x34] sm:$0xf]
        %v1372 = vld [vmem:[%s661 + $0x38] sm:$0xf]
        %v1373 = vld [vmem:[%s661 + $0x3c] sm:$0xf]
        %v1374 = vld [vmem:[%s664] sm:$0x1]
        %v1375 = vld [vmem:[#allocation2] sm:$0xff]
        %v1376 = vld [vmem:[#allocation2 + $0x8] sm:$0xff]
        %v1377 = vsel %vm681, %v1375, 0.0
        %1378 = vadd.xlane.f32.xlu0 %v1377
        %v1379 = vpop.xlane.xlu0 %1378
        %v1380 = vsel %vm681, %v1376, 0.0
        %1381 = vadd.xlane.f32.xlu0 %v1380
        %v1382 = vpop.xlane.xlu0 %1381
        %v1383 = vmul.f32 %v1379, %v694
        %v1384 = vmul.f32 %v1382, %v694
        %v1385 = vsub.f32 %v1375, %v1383
        %v1386 = vsub.f32 %v1376, %v1384
        %v1387 = vmul.f32 %v1385, %v1385
        %v1388 = vmul.f32 %v1386, %v1386
        %v1389 = vsel %vm681, %v1387, 0.0
        %1390 = vadd.xlane.f32.xlu0 %v1389
        %v1391 = vpop.xlane.xlu0 %1390
        %v1392 = vsel %vm681, %v1388, 0.0
        %1393 = vadd.xlane.f32.xlu0 %v1392
        %v1394 = vpop.xlane.xlu0 %1393
        %v1395 = vmul.f32 %v1391, %v694
        %v1396 = vmul.f32 %v1394, %v694
        %v1397 = vadd.f32 %v1395, 1e-05
        %v1398 = vadd.f32 %v1396, 1e-05
        %v1399 = vrsqrt.pop %v1397
        %v1400 = vmul.f32 %v1399, %v1397
        %v1401 = vmul.f32 %v1400, %v1399
        %v1402 = vmul.f32 0.5, %v1401
        %v1403 = vsub.f32 1.5, %v1402
        %v1404 = vmul.f32 %v1399, %v1403
        %vm1405 = vweird.f32 %v1397
        %vm1406 = vweird.f32 %v1399
        %vm1407 = vmor %vm1405, %vm1406
        %v1408 = vsel %vm1407, %v1399, %v1404
        %v1409 = vrsqrt.pop %v1398
        %v1410 = vmul.f32 %v1409, %v1398
        %v1411 = vmul.f32 %v1410, %v1409
        %v1412 = vmul.f32 0.5, %v1411
        %v1413 = vsub.f32 1.5, %v1412
        %v1414 = vmul.f32 %v1409, %v1413
        %vm1415 = vweird.f32 %v1398
        %vm1416 = vweird.f32 %v1409
        %vm1417 = vmor %vm1415, %vm1416
        %v1418 = vsel %vm1417, %v1409, %v1414
        %v1419 = vmul.f32 %v1385, %v1408
        %v1420 = vmul.f32 %v1386, %v1418
        %v1422 = vperm.slane %v1351, 0
        %v1424 = vmul.f32 %v1419, %v1422
        %v1425 = vmul.f32 %v1420, %v1422
        %v1427 = vperm.slane %v1352, 0
        %v1429 = vadd.f32 %v1424, %v1427
        %v1430 = vadd.f32 %v1425, %v1427
        %v1431 = vpack.c.bf16 %v1430, %v1429
        %v1433 = vperm.slane %v1357, 0
        %v1439 = vunpack.c.l.b16 %v1353
        %v1440 = vunpack.c.l.b16 %v1354
        %v1441 = vunpack.c.l.b16 %v1355
        %v1442 = vunpack.c.l.b16 %v1356
        %v1443 = vpack.c.b16 %v1440, %v1439
        %v1444 = vpack.c.b16 %v1442, %v1441
        %v1448 = vsel %vm681, %v1431, 0
        %1450 = vmatpush.bf16.msra.mxu0 0
        %1451 = vmatpush.bf16.msra.mxu0 0
        %1452 = vmatpush.bf16.msra.mxu0 0
        %1453 = vmatpush.bf16.msra.mxu0 0
        %1454 = vmatpush.bf16.msra.mxu0 0
        %1455 = vmatpush.bf16.msra.mxu0 0
        %1456 = vmatpush.bf16.msra.mxu0 %v1444
        %1457 = vmatpush.bf16.msra.mxu0 %v1443
        %1458 = vmatmul.bf16.gmra.mxu0 %v1448
        %v1459 = vpop.f32.mrf.mxu0
        %v1460 = vadd.f32 %v1433, %v1459
        %v1461 = vpop.f32.mrf.mxu0
        %v1462 = vadd.f32 %v1433, %v1461
        %1463 = vdwg.mxu0
        %v1464 = vmul.f32 %v1460, 1.702
        %v1465 = vmul.f32 %v1462, 1.702
        %v1466 = vxor.u32 %v1464, 2147483648
        %v1467 = vxor.u32 %v1465, 2147483648
        %v1468 = vmul.f32 %v1466, 1.442695
        %v1469 = vpow.pop %v1468
        %v1470 = vmul.f32 %v1467, 1.442695
        %v1471 = vpow.pop %v1470
        %v1472 = vadd.f32 %v1469, 1.0
        %v1473 = vadd.f32 %v1471, 1.0
        %v1474 = vrcp.pop %v1472
        %v1475 = vmul.f32 %v1472, %v1474
        %v1476 = vsub.f32 1.0, %v1475
        %v1477 = vmul.f32 %v1474, %v1476
        %v1478 = vadd.f32 %v1474, %v1477
        %vm1479 = vweird.f32 %v1472
        %vm1480 = vweird.f32 %v1474
        %vm1481 = vmor %vm1479, %vm1480
        %v1482 = vsel %vm1481, %v1474, %v1478
        %v1483 = vand.u32 2147483647, %v1472
        %vm1484 = vcmp.eq.f32.partialorder %v1483, 8.507059e+37
        %v1485 = vand.u32 %v1472, 2147483648
        %v1486 = vor.u32 1.1754944e-38, %v1485
        %v1487 = vsel %vm1484, %v1486, %v1482
        %v1488 = vmul.f32 1.0, %v1487
        %v1489 = vrcp.pop %v1473
        %v1490 = vmul.f32 %v1473, %v1489
        %v1491 = vsub.f32 1.0, %v1490
        %v1492 = vmul.f32 %v1489, %v1491
        %v1493 = vadd.f32 %v1489, %v1492
        %vm1494 = vweird.f32 %v1473
        %vm1495 = vweird.f32 %v1489
        %vm1496 = vmor %vm1494, %vm1495
        %v1497 = vsel %vm1496, %v1489, %v1493
        %v1498 = vand.u32 2147483647, %v1473
        %vm1499 = vcmp.eq.f32.partialorder %v1498, 8.507059e+37
        %v1500 = vand.u32 %v1473, 2147483648
        %v1501 = vor.u32 1.1754944e-38, %v1500
        %v1502 = vsel %vm1499, %v1501, %v1497
        %v1503 = vmul.f32 1.0, %v1502
        %v1504 = vmul.f32 %v1488, %v1460
        %v1505 = vmul.f32 %v1503, %v1462
        %v1506 = vpack.c.bf16 %v1505, %v1504
        %v1508 = vperm.slane %v1374, 0
        %v1526 = vunpack.c.l.b16 %v1358
        %v1527 = vunpack.c.l.b16 %v1359
        %v1528 = vunpack.c.l.b16 %v1360
        %v1529 = vunpack.c.l.b16 %v1361
        %v1530 = vunpack.c.l.b16 %v1362
        %v1531 = vunpack.c.l.b16 %v1363
        %v1532 = vunpack.c.l.b16 %v1364
        %v1533 = vunpack.c.l.b16 %v1365
        %v1534 = vunpack.c.l.b16 %v1366
        %v1535 = vunpack.c.l.b16 %v1367
        %v1536 = vunpack.c.l.b16 %v1368
        %v1537 = vunpack.c.l.b16 %v1369
        %v1538 = vunpack.c.l.b16 %v1370
        %v1539 = vunpack.c.l.b16 %v1371
        %v1540 = vunpack.c.l.b16 %v1372
        %v1541 = vunpack.c.l.b16 %v1373
        %v1542 = vpack.c.b16 %v1527, %v1526
        %v1543 = vpack.c.b16 %v1529, %v1528
        %v1544 = vpack.c.b16 %v1531, %v1530
        %v1545 = vpack.c.b16 %v1533, %v1532
        %v1546 = vpack.c.b16 %v1535, %v1534
        %v1547 = vpack.c.b16 %v1537, %v1536
        %v1548 = vpack.c.b16 %v1539, %v1538
        %v1549 = vpack.c.b16 %v1541, %v1540
        %1558 = vmatpush.bf16.msra.mxu0 %v1549
        %1559 = vmatpush.bf16.msra.mxu0 %v1548
        %1560 = vmatpush.bf16.msra.mxu0 %v1547
        %1561 = vmatpush.bf16.msra.mxu0 %v1546
        %1562 = vmatpush.bf16.msra.mxu0 %v1545
        %1563 = vmatpush.bf16.msra.mxu0 %v1544
        %1564 = vmatpush.bf16.msra.mxu0 %v1543
        %1565 = vmatpush.bf16.msra.mxu0 %v1542
        %1566 = vmatmul.bf16.gmra.mxu0 %v1506
        %v1567 = vpop.f32.mrf.mxu0
        %v1568 = vadd.f32 %v1508, %v1567
        %v1569 = vpop.f32.mrf.mxu0
        %v1570 = vadd.f32 %v1508, %v1569
        %1571 = vdwg.mxu0
        %v1572 = vadd.f32 %v1375, %v1568
        %v1573 = vadd.f32 %v1376, %v1570
        %1574 = vst.msk [vmem:[#allocation2] sm:$0xff] %vm681, %v1572
        %1575 = vst.msk [vmem:[#allocation2 + $0x8] sm:$0xff] %vm681, %v1573
        %p1576 = scmp.eq.s32.totalorder %s31, 1
        // Predicated region
        $region81: #{tpu_custom_call.1} parent=75 // pred_check
          %p1577 = pneg %p1576
        $region82: #{tpu_custom_call.1} parent=75 // pred_check_branch
          %1579 = sbr.rel (%p1577) target = $region84
        $region83: #{tpu_custom_call.1} parent=75 // pred_region
          %v1580 = vld [vmem:[#allocation2] sm:$0xff]
          %v1581 = vld [vmem:[#allocation2 + $0x8] sm:$0xff]
          %1582 = vst.msk [vmem:[#allocation4] sm:$0xff] %vm681, %v1580
          %1583 = vst.msk [vmem:[#allocation4 + $0x8] sm:$0xff] %vm681, %v1581
        $region84: #{tpu_custom_call.1} parent=75 // pred_fallthru
          _
        // Predicated region
        $region85: #{tpu_custom_call.1} parent=75 // pred_check
          %p1584 = pneg %p415
        $region86: #{tpu_custom_call.1} parent=75 // pred_check_branch
          %1586 = sbr.rel (%p1584) target = $region88
        $region87: #{tpu_custom_call.1} parent=75 // pred_region
          %s1587 = smul.u32 2, %s30
          %1589 = vsyncadd [#allocation5], 0
          %s1590 = smul.addr %s1587, 8
          %s1591 = scalar_lea.hbm %s14, %s1590
          %s1592 = sshll.u32 [#allocation4], 4
          %s1593 = int_to_ptr.vmem [resolvable:$true] %s1592
          %s1594 = sshll.u32 %s1591, 4
          %s1595 = int_to_ptr.hbm [resolvable:$true] %s1594
          %1600 = dma.vmem_to_hbm [thread:$0]  %s1593, 256, %s1595, [#allocation5], 128, 128, 8
        $region88: #{tpu_custom_call.1} parent=75 // pred_fallthru
          _
        // Predicated region
        $region89: #{tpu_custom_call.1} parent=75 // pred_check
          %p1601 = pneg %p415
        $region90: #{tpu_custom_call.1} parent=75 // pred_check_branch
          %1603 = sbr.rel (%p1601) target = $region92
        $region91: #{tpu_custom_call.1} parent=75 // pred_region
          %1605 = dma.done [#allocation5], 256
        $region92: #{tpu_custom_call.1} parent=75 // pred_fallthru
          _
      $region76: #{tpu_custom_call.1} parent=5 // pred_fallthru
        _
      %p1606 = scmp.le.s32.totalorder 2, %s21
      // Predicated region
      $region93: #{tpu_custom_call.1} parent=5 // pred_check
        %p1607 = pneg %p1606
      $region94: #{tpu_custom_call.1} parent=5 // pred_check_branch
        %1609 = sbr.rel (%p1607) target = $region96
      $region95: #{tpu_custom_call.1} parent=5 // pred_region
        %s1610 = ssub.s32 %s21, 2
      $region96: #{tpu_custom_call.1} parent=5 // pred_fallthru
        _
    $region6: #{tpu_custom_call.1} parent=1 // loop_footer
      %s25 = sadd.s32 1, %s21
    $region7: #{tpu_custom_call.1} parent=1 // loop_footer_branch
      %20 = sbr.rel target = $region3
    $region8: #{tpu_custom_call.1} parent=1 // loop_exit
      _
    %1611 = vsyncpa [#allocation5], 1
    %s1612 = scalar_lea.sflag [#allocation5], 1
    %1613 = vsyncpa %s1612, 1

</llo_original>
